<compile_context>
chip_gen: v6e
topology: v6e:2x2x1
jax: 0.10.0
libtpu: 0.0.40
codegen_flags: <defaults>
</compile_context>

<pallas_src>
import jax
import jax.numpy as jnp
from jax.experimental import pallas as pl
from jax.experimental.pallas import tpu as pltpu


_LEAKY_SLOPE = 0.1

# Hidden-layer widths fixed by the module: fc4, fc5, fc6, fc7, fc_out.
_H4, _H5, _H6, _H7, _HO = 64, 128, 64, 32, 1
# Row offsets of the packed column-bias vector (all multiples of 8 -> aligned).
_B4_OFF = 0
_B5_OFF = _B4_OFF + _H4      # 64
_B6_OFF = _B5_OFF + _H5      # 192
_B7_OFF = _B6_OFF + _H6      # 256
_BO_OFF = _B7_OFF + _H7      # 288
_BCOL_LEN = _BO_OFF + _HO    # 289


def _leaky_relu(v):
    return jnp.where(v > 0, v, _LEAKY_SLOPE * v)


def _relu(v):
    return jnp.maximum(v, 0.0)


def _dot_nt(a, b):
    """a: [M, K], b: [N, K]  ->  a @ b.T : [M, N]  (f32 MXU accumulation)."""
    return jax.lax.dot_general(
        a, b, (((1,), (1,)), ((), ())), preferred_element_type=jnp.float32)


def fcnn_kernel(
    x_ref,        # [tb, num_neigh]   raw batch tile (natural layout, input_dtype)
    m_ref,        # [tb, meteo_dim]
    w1t_ref,      # [num_neigh, 32]   fc1 weight^T, zero-padded into cols [0:16)
    w2t_ref,      # [meteo_dim, 32]   fc2 weight^T, zero-padded into cols [16:32)
    b12_ref,      # [1, 32]           concat(fc1.bias, fc2.bias) as a row (f32)
    w4_ref,       # [64, 32]   f32
    w5_ref,       # [128, 64]  f32
    w6_ref,       # [64, 128]  f32
    w7_ref,       # [32, 64]   f32
    woc_ref,      # [32, 1]    fc_out weight as a column (f32)
    bcol_ref,     # [289, 1]   packed fc4..fc7 + fc_out biases (column, f32)
    out_ref,      # [1, tb]    lane-dense output row
):
    f32 = jnp.float32

    # ---- fc1 / fc2 + concat + LeakyReLU, natural [tb, feat] layout -----------
    # The two transposed weights occupy disjoint column halves, so the concat
    # of the two embeddings is just a sum of the two matmul results.
    e = jnp.dot(x_ref[...], w1t_ref[...], preferred_element_type=f32)
    e = e + jnp.dot(m_ref[...], w2t_ref[...], preferred_element_type=f32)
    e = _leaky_relu(e + b12_ref[...])                                  # [tb, 32]

    # ---- fc4: switch to the transposed [feat, tb] layout via a trans_b matmul.
    h = _relu(_dot_nt(w4_ref[...], e) + bcol_ref[_B4_OFF:_B5_OFF, :])  # [64, tb]

    # ---- fc5..fc7: plain [out,in] @ [in,tb] matmuls, f32 end-to-end ----------
    h = _relu(jnp.dot(w5_ref[...], h, preferred_element_type=f32)
              + bcol_ref[_B5_OFF:_B6_OFF, :])                          # [128, tb]
    h = _relu(jnp.dot(w6_ref[...], h, preferred_element_type=f32)
              + bcol_ref[_B6_OFF:_B7_OFF, :])                          # [64, tb]
    h = _relu(jnp.dot(w7_ref[...], h, preferred_element_type=f32)
              + bcol_ref[_B7_OFF:_BO_OFF, :])                          # [32, tb]

    # ---- fc_out: 1-row matmul -> VPU multiply + XLU sublane reduction --------
    out = jnp.sum(woc_ref[...] * h, axis=0, keepdims=True) \
        + bcol_ref[_BO_OFF:_BCOL_LEN, :]                               # [1, tb]
    out_ref[...] = out.astype(out_ref.dtype)


def fcnn_forward(x, meteo, params, *, tb=2048, input_dtype=jnp.bfloat16):
    """x: [B, num_neigh], meteo: [B, meteo_dim] -> [B, 1].

    params are in PyTorch nn.Linear layout: weight [out, in], bias [out].
    `input_dtype` applies only to the per-batch input stream (and the matching
    fc1/fc2 weights); hidden layers and accumulation stay float32.
    """
    B, num_neigh = x.shape
    B2, meteo_dim = meteo.shape
    assert B == B2, "x and meteo must share the batch dimension"

    (w1, b1, w2, b2, w4, b4, w5, b5, w6, b6, w7, b7, wo, bo) = params

    # --- batch tile selection --------------------------------------------------
    def _round_up(v, m):
        return ((v + m - 1) // m) * m

    tb = _round_up(max(int(tb), 128), 128)           # lane-aligned output block
    # Keep >= 2 grid tiles whenever possible so both v7x TensorCores get work.
    half = _round_up(max(-(-B // 2), 1), 128)
    tb_eff = max(128, min(tb, half))
    num_tiles = -(-B // tb_eff)
    Bp = num_tiles * tb_eff

    # --- weights (preprocessed once; constant index_map -> VMEM resident) ------
    w1t = jnp.zeros((num_neigh, 32), jnp.float32).at[:, :16].set(w1.T)
    w2t = jnp.zeros((meteo_dim, 32), jnp.float32).at[:, 16:].set(w2.T)
    w1t = w1t.astype(input_dtype)
    w2t = w2t.astype(input_dtype)
    b12 = jnp.concatenate([b1, b2]).reshape(1, 32).astype(jnp.float32)
    bcol = jnp.concatenate([b4, b5, b6, b7, bo]).reshape(-1, 1).astype(jnp.float32)
    woc = wo.reshape(32, 1).astype(jnp.float32)      # fc_out weight as a column

    weights = [w1t, w2t, b12,
               w4.astype(jnp.float32), w5.astype(jnp.float32),
               w6.astype(jnp.float32), w7.astype(jnp.float32),
               woc, bcol]

    # --- inputs: no wrapper concat/transpose; pad only when B % tb_eff != 0 ----
    xp = x.astype(input_dtype)
    mp = meteo.astype(input_dtype)
    if Bp != B:
        xp = jnp.pad(xp, ((0, Bp - B), (0, 0)))
        mp = jnp.pad(mp, ((0, Bp - B), (0, 0)))

    in_specs = [
        pl.BlockSpec((tb_eff, num_neigh), lambda i: (i, 0)),
        pl.BlockSpec((tb_eff, meteo_dim), lambda i: (i, 0)),
    ]
    for wgt in weights:
        # Constant index_map -> DMA'd once, stays resident across grid steps.
        in_specs.append(pl.BlockSpec(wgt.shape, lambda i: (0, 0)))

    # VMEM budget scaled with the tile; v5e's 16 MiB scoped default is the trap
    # at large tb, so set it explicitly, capped at v7x's 64 MiB physical VMEM.
    itemsize = jnp.dtype(input_dtype).itemsize
    est = (2 * 2 * tb_eff * (num_neigh + meteo_dim) * itemsize   # dbl-buffered inputs
           + 4 * tb_eff * (32 + 32 + 64 + 128 + 64 + 32)         # live f32 activations
           + 2 * 2 * tb_eff * 4                                  # dbl-buffered output
           + (2 << 20))                                          # weights + scratch
    vmem_limit = int(min(64 << 20, max(32 << 20, 2 * est)))

    out = pl.pallas_call(
        fcnn_kernel,
        out_shape=jax.ShapeDtypeStruct((1, Bp), jnp.float32),
        grid_spec=pltpu.PrefetchScalarGridSpec(
            num_scalar_prefetch=0,
            grid=(num_tiles,),
            in_specs=in_specs,
            out_specs=pl.BlockSpec((1, tb_eff), lambda i: (0, i)),
        ),
        compiler_params=pltpu.CompilerParams(
            dimension_semantics=("parallel",),
            vmem_limit_bytes=vmem_limit),
    )(xp, mp, *weights)

    return out[0, :B].reshape(B, 1)


def init_params(key, num_neigh, meteo_dim):
    """Mimics nn.Linear default init. PyTorch layout: W [out, in], b [out]."""
    dims = [
        (num_neigh, 16),   # fc1
        (meteo_dim, 16),   # fc2
        (32, 64),          # fc4
        (64, 128),         # fc5
        (128, 64),         # fc6
        (64, 32),          # fc7
        (32, 1),           # fc_out
    ]
    params = []
    for (fan_in, fan_out) in dims:
        key, kw, kb = jax.random.split(key, 3)
        bound = 1.0 / jnp.sqrt(jnp.float32(fan_in))
        w = jax.random.uniform(kw, (fan_out, fan_in), jnp.float32, -bound, bound)
        b = jax.random.uniform(kb, (fan_out,), jnp.float32, -bound, bound)
        params += [w, b]
    return tuple(params)


def fcnn_reference(x, meteo, params):
    (w1, b1, w2, b2, w4, b4, w5, b5, w6, b6, w7, b7, wo, bo) = params
    leaky = lambda v: jnp.where(v > 0, v, 0.1 * v)
    relu = lambda v: jnp.maximum(v, 0.0)
    x_e = leaky(x @ w1.T + b1)
    m_e = leaky(meteo @ w2.T + b2)
    h = jnp.concatenate([x_e, m_e], axis=-1)
    h = relu(h @ w4.T + b4)
    h = relu(h @ w5.T + b5)
    h = relu(h @ w6.T + b6)
    h = relu(h @ w7.T + b7)
    return h @ wo.T + bo


if __name__ == "__main__":
    num_neigh = 8
    meteo_dim = 5

    key = jax.random.PRNGKey(0)
    kx, km, kp = jax.random.split(key, 3)
    params = init_params(kp, num_neigh, meteo_dim)

    # Case 1: small batch, f32 input stream -> tight tolerance.
    B = 256
    x = jax.random.normal(kx, (B, num_neigh), jnp.float32)
    meteo = jax.random.normal(km, (B, meteo_dim), jnp.float32)
    ref = fcnn_reference(x, meteo, params)
    out = jax.block_until_ready(
        fcnn_forward(x, meteo, params, input_dtype=jnp.float32))
    assert out.shape == (B, 1)
    assert jnp.allclose(out, ref, atol=1e-3, rtol=1e-3), \
        float(jnp.max(jnp.abs(out - ref)))

    # Case 2: default bf16 input stream (halved HBM input traffic); hidden
    # layers stay f32, so tolerance only needs to absorb input rounding.
    out_bf16 = jax.block_until_ready(fcnn_forward(x, meteo, params))
    assert out_bf16.shape == (B, 1)
    assert jnp.allclose(out_bf16, ref, atol=3e-2, rtol=3e-2), \
        float(jnp.max(jnp.abs(out_bf16 - ref)))

    # Case 3: batch NOT divisible by the tile -> padded in the wrapper,
    # sliced back to B rows afterwards.
    B2 = 300
    x2 = jax.random.normal(jax.random.PRNGKey(1), (B2, num_neigh), jnp.float32)
    m2 = jax.random.normal(jax.random.PRNGKey(2), (B2, meteo_dim), jnp.float32)
    ref2 = fcnn_reference(x2, m2, params)
    out2 = jax.block_until_ready(
        fcnn_forward(x2, m2, params, input_dtype=jnp.float32))
    assert out2.shape == (B2, 1)
    assert jnp.allclose(out2, ref2, atol=1e-3, rtol=1e-3), \
        float(jnp.max(jnp.abs(out2 - ref2)))

    print("KERNEL_OK")
</pallas_src>

<mosaic_0001>
module attributes {stable_mosaic.version = 11 : i64} {
  func.func @fcnn_kernel(%arg0: i32, %arg1: memref<128x8xf32, #tpu.memory_space<vmem>>, %arg2: memref<128x5xf32, #tpu.memory_space<vmem>>, %arg3: memref<8x32xf32, #tpu.memory_space<vmem>>, %arg4: memref<5x32xf32, #tpu.memory_space<vmem>>, %arg5: memref<1x32xf32, #tpu.memory_space<vmem>>, %arg6: memref<64x32xf32, #tpu.memory_space<vmem>>, %arg7: memref<128x64xf32, #tpu.memory_space<vmem>>, %arg8: memref<64x128xf32, #tpu.memory_space<vmem>>, %arg9: memref<32x64xf32, #tpu.memory_space<vmem>>, %arg10: memref<32x1xf32, #tpu.memory_space<vmem>>, %arg11: memref<289x1xf32, #tpu.memory_space<vmem>>, %arg12: memref<1x128xf32, #tpu.memory_space<vmem>>) attributes {dimension_semantics = [#tpu.dimension_semantics<parallel>], iteration_bounds = array<i64: 2>, scalar_prefetch = 0 : i64, scratch_operands = 0 : i64, tpu.core_type = #tpu.core_type<tc>, window_params = [{transform_indices = @transform_0, window_bounds = array<i64: 128, 8>}, {transform_indices = @transform_1, window_bounds = array<i64: 128, 5>}, {pipeline_mode = #tpu.pipeline_mode<synchronous>, transform_indices = @transform_2, window_bounds = array<i64: 8, 32>}, {pipeline_mode = #tpu.pipeline_mode<synchronous>, transform_indices = @transform_3, window_bounds = array<i64: 5, 32>}, {pipeline_mode = #tpu.pipeline_mode<synchronous>, transform_indices = @transform_4, window_bounds = array<i64: 1, 32>}, {pipeline_mode = #tpu.pipeline_mode<synchronous>, transform_indices = @transform_5, window_bounds = array<i64: 64, 32>}, {pipeline_mode = #tpu.pipeline_mode<synchronous>, transform_indices = @transform_6, window_bounds = array<i64: 128, 64>}, {pipeline_mode = #tpu.pipeline_mode<synchronous>, transform_indices = @transform_7, window_bounds = array<i64: 64, 128>}, {pipeline_mode = #tpu.pipeline_mode<synchronous>, transform_indices = @transform_8, window_bounds = array<i64: 32, 64>}, {pipeline_mode = #tpu.pipeline_mode<synchronous>, transform_indices = @transform_9, window_bounds = array<i64: 32, 1>}, {pipeline_mode = #tpu.pipeline_mode<synchronous>, transform_indices = @transform_10, window_bounds = array<i64: 289, 1>}, {transform_indices = @transform_11, window_bounds = array<i64: 1, 128>}]} {
    %c0 = arith.constant 0 : index
    %c0_0 = arith.constant 0 : index
    %0 = vector.load %arg1[%c0, %c0_0] : memref<128x8xf32, #tpu.memory_space<vmem>>, vector<128x8xf32>
    %c0_1 = arith.constant 0 : index
    %c0_2 = arith.constant 0 : index
    %1 = vector.load %arg3[%c0_1, %c0_2] : memref<8x32xf32, #tpu.memory_space<vmem>>, vector<8x32xf32>
    %cst = arith.constant dense<0.000000e+00> : vector<128x32xf32>
    %2 = tpu.matmul %0, %1, %cst {dimension_numbers = #tpu.dot_dimension_numbers<[1], [0], [0], [1], [0, 0, 1, 1], [], []>} : vector<128x8xf32>, vector<8x32xf32>, vector<128x32xf32> -> vector<128x32xf32>
    %c0_3 = arith.constant 0 : index
    %c0_4 = arith.constant 0 : index
    %3 = vector.load %arg2[%c0_3, %c0_4] : memref<128x5xf32, #tpu.memory_space<vmem>>, vector<128x5xf32>
    %c0_5 = arith.constant 0 : index
    %c0_6 = arith.constant 0 : index
    %4 = vector.load %arg4[%c0_5, %c0_6] : memref<5x32xf32, #tpu.memory_space<vmem>>, vector<5x32xf32>
    %cst_7 = arith.constant dense<0.000000e+00> : vector<128x32xf32>
    %5 = tpu.matmul %3, %4, %cst_7 {dimension_numbers = #tpu.dot_dimension_numbers<[1], [0], [0], [1], [0, 0, 1, 1], [], []>} : vector<128x5xf32>, vector<5x32xf32>, vector<128x32xf32> -> vector<128x32xf32>
    %6 = arith.addf %2, %5 : vector<128x32xf32>
    %c0_8 = arith.constant 0 : index
    %c0_9 = arith.constant 0 : index
    %7 = vector.load %arg5[%c0_8, %c0_9] : memref<1x32xf32, #tpu.memory_space<vmem>>, vector<1x32xf32>
    %8 = vector.broadcast %7 : vector<1x32xf32> to vector<128x32xf32>
    %9 = arith.addf %6, %8 : vector<128x32xf32>
    %cst_10 = arith.constant 0.000000e+00 : f32
    %10 = vector.broadcast %cst_10 : f32 to vector<128x32xf32>
    %11 = arith.cmpf ogt, %9, %10 : vector<128x32xf32>
    %cst_11 = arith.constant 1.000000e-01 : f32
    %12 = vector.broadcast %cst_11 : f32 to vector<128x32xf32>
    %13 = arith.mulf %12, %9 : vector<128x32xf32>
    %14 = arith.select %11, %9, %13 : vector<128x32xi1>, vector<128x32xf32>
    %c0_12 = arith.constant 0 : index
    %c0_13 = arith.constant 0 : index
    %15 = vector.load %arg6[%c0_12, %c0_13] : memref<64x32xf32, #tpu.memory_space<vmem>>, vector<64x32xf32>
    %cst_14 = arith.constant dense<0.000000e+00> : vector<64x128xf32>
    %16 = tpu.matmul %15, %14, %cst_14 {dimension_numbers = #tpu.dot_dimension_numbers<[1], [1], [0], [0], [0, 0, 1, 0], [], []>} : vector<64x32xf32>, vector<128x32xf32>, vector<64x128xf32> -> vector<64x128xf32>
    %c0_15 = arith.constant 0 : index
    %c0_16 = arith.constant 0 : index
    %17 = vector.load %arg11[%c0_15, %c0_16] : memref<289x1xf32, #tpu.memory_space<vmem>>, vector<64x1xf32>
    %18 = vector.broadcast %17 : vector<64x1xf32> to vector<64x128xf32>
    %19 = arith.addf %16, %18 : vector<64x128xf32>
    %cst_17 = arith.constant 0.000000e+00 : f32
    %20 = vector.broadcast %cst_17 : f32 to vector<64x128xf32>
    %21 = arith.maximumf %19, %20 : vector<64x128xf32>
    %c0_18 = arith.constant 0 : index
    %c0_19 = arith.constant 0 : index
    %22 = vector.load %arg7[%c0_18, %c0_19] : memref<128x64xf32, #tpu.memory_space<vmem>>, vector<128x64xf32>
    %cst_20 = arith.constant dense<0.000000e+00> : vector<128x128xf32>
    %23 = tpu.matmul %22, %21, %cst_20 {dimension_numbers = #tpu.dot_dimension_numbers<[1], [0], [0], [1], [0, 0, 1, 1], [], []>} : vector<128x64xf32>, vector<64x128xf32>, vector<128x128xf32> -> vector<128x128xf32>
    %c64 = arith.constant 64 : index
    %c0_21 = arith.constant 0 : index
    %24 = vector.load %arg11[%c64, %c0_21] : memref<289x1xf32, #tpu.memory_space<vmem>>, vector<128x1xf32>
    %25 = vector.broadcast %24 : vector<128x1xf32> to vector<128x128xf32>
    %26 = arith.addf %23, %25 : vector<128x128xf32>
    %cst_22 = arith.constant 0.000000e+00 : f32
    %27 = vector.broadcast %cst_22 : f32 to vector<128x128xf32>
    %28 = arith.maximumf %26, %27 : vector<128x128xf32>
    %c0_23 = arith.constant 0 : index
    %c0_24 = arith.constant 0 : index
    %29 = vector.load %arg8[%c0_23, %c0_24] : memref<64x128xf32, #tpu.memory_space<vmem>>, vector<64x128xf32>
    %cst_25 = arith.constant dense<0.000000e+00> : vector<64x128xf32>
    %30 = tpu.matmul %29, %28, %cst_25 {dimension_numbers = #tpu.dot_dimension_numbers<[1], [0], [0], [1], [0, 0, 1, 1], [], []>} : vector<64x128xf32>, vector<128x128xf32>, vector<64x128xf32> -> vector<64x128xf32>
    %c192 = arith.constant 192 : index
    %c0_26 = arith.constant 0 : index
    %31 = vector.load %arg11[%c192, %c0_26] : memref<289x1xf32, #tpu.memory_space<vmem>>, vector<64x1xf32>
    %32 = vector.broadcast %31 : vector<64x1xf32> to vector<64x128xf32>
    %33 = arith.addf %30, %32 : vector<64x128xf32>
    %cst_27 = arith.constant 0.000000e+00 : f32
    %34 = vector.broadcast %cst_27 : f32 to vector<64x128xf32>
    %35 = arith.maximumf %33, %34 : vector<64x128xf32>
    %c0_28 = arith.constant 0 : index
    %c0_29 = arith.constant 0 : index
    %36 = vector.load %arg9[%c0_28, %c0_29] : memref<32x64xf32, #tpu.memory_space<vmem>>, vector<32x64xf32>
    %cst_30 = arith.constant dense<0.000000e+00> : vector<32x128xf32>
    %37 = tpu.matmul %36, %35, %cst_30 {dimension_numbers = #tpu.dot_dimension_numbers<[1], [0], [0], [1], [0, 0, 1, 1], [], []>} : vector<32x64xf32>, vector<64x128xf32>, vector<32x128xf32> -> vector<32x128xf32>
    %c256 = arith.constant 256 : index
    %c0_31 = arith.constant 0 : index
    %38 = vector.load %arg11[%c256, %c0_31] : memref<289x1xf32, #tpu.memory_space<vmem>>, vector<32x1xf32>
    %39 = vector.broadcast %38 : vector<32x1xf32> to vector<32x128xf32>
    %40 = arith.addf %37, %39 : vector<32x128xf32>
    %cst_32 = arith.constant 0.000000e+00 : f32
    %41 = vector.broadcast %cst_32 : f32 to vector<32x128xf32>
    %42 = arith.maximumf %40, %41 : vector<32x128xf32>
    %c0_33 = arith.constant 0 : index
    %c0_34 = arith.constant 0 : index
    %43 = vector.load %arg10[%c0_33, %c0_34] : memref<32x1xf32, #tpu.memory_space<vmem>>, vector<32x1xf32>
    %44 = vector.broadcast %43 : vector<32x1xf32> to vector<32x128xf32>
    %45 = arith.mulf %44, %42 : vector<32x128xf32>
    %cst_35 = arith.constant dense<0.000000e+00> : vector<128xf32>
    %46 = vector.multi_reduction <add>, %45, %cst_35 [0] : vector<32x128xf32> to vector<128xf32>
    %47 = vector.shape_cast %46 : vector<128xf32> to vector<1x128xf32>
    %c288 = arith.constant 288 : index
    %c0_36 = arith.constant 0 : index
    %48 = vector.load %arg11[%c288, %c0_36] : memref<289x1xf32, #tpu.memory_space<vmem>>, vector<1x1xf32>
    %49 = vector.broadcast %48 : vector<1x1xf32> to vector<1x128xf32>
    %50 = arith.addf %47, %49 : vector<1x128xf32>
    %c0_37 = arith.constant 0 : index
    %c0_38 = arith.constant 0 : index
    %51 = vector.load %arg12[%c0_37, %c0_38] : memref<1x128xf32, #tpu.memory_space<vmem>>, vector<1x128xf32>
    tpu.vector_store %arg12[%c0_37, %c0_38], %50 {strides = array<i32>} : memref<1x128xf32, #tpu.memory_space<vmem>>, vector<1x128xf32>,
    return
  }
  func.func @transform_0(%arg0: i32) -> (i32, i32) {
    %c0_i32 = arith.constant 0 : i32
    %c0_i32_0 = arith.constant 0 : i32
    return %arg0, %c0_i32 : i32, i32
  }
  func.func @transform_1(%arg0: i32) -> (i32, i32) {
    %c0_i32 = arith.constant 0 : i32
    %c0_i32_0 = arith.constant 0 : i32
    return %arg0, %c0_i32 : i32, i32
  }
  func.func @transform_2(%arg0: i32) -> (i32, i32) {
    %c0_i32 = arith.constant 0 : i32
    %c0_i32_0 = arith.constant 0 : i32
    %c0_i32_1 = arith.constant 0 : i32
    return %c0_i32, %c0_i32_0 : i32, i32
  }
  func.func @transform_3(%arg0: i32) -> (i32, i32) {
    %c0_i32 = arith.constant 0 : i32
    %c0_i32_0 = arith.constant 0 : i32
    %c0_i32_1 = arith.constant 0 : i32
    return %c0_i32, %c0_i32_0 : i32, i32
  }
  func.func @transform_4(%arg0: i32) -> (i32, i32) {
    %c0_i32 = arith.constant 0 : i32
    %c0_i32_0 = arith.constant 0 : i32
    %c0_i32_1 = arith.constant 0 : i32
    return %c0_i32, %c0_i32_0 : i32, i32
  }
  func.func @transform_5(%arg0: i32) -> (i32, i32) {
    %c0_i32 = arith.constant 0 : i32
    %c0_i32_0 = arith.constant 0 : i32
    %c0_i32_1 = arith.constant 0 : i32
    return %c0_i32, %c0_i32_0 : i32, i32
  }
  func.func @transform_6(%arg0: i32) -> (i32, i32) {
    %c0_i32 = arith.constant 0 : i32
    %c0_i32_0 = arith.constant 0 : i32
    %c0_i32_1 = arith.constant 0 : i32
    return %c0_i32, %c0_i32_0 : i32, i32
  }
  func.func @transform_7(%arg0: i32) -> (i32, i32) {
    %c0_i32 = arith.constant 0 : i32
    %c0_i32_0 = arith.constant 0 : i32
    %c0_i32_1 = arith.constant 0 : i32
    return %c0_i32, %c0_i32_0 : i32, i32
  }
  func.func @transform_8(%arg0: i32) -> (i32, i32) {
    %c0_i32 = arith.constant 0 : i32
    %c0_i32_0 = arith.constant 0 : i32
    %c0_i32_1 = arith.constant 0 : i32
    return %c0_i32, %c0_i32_0 : i32, i32
  }
  func.func @transform_9(%arg0: i32) -> (i32, i32) {
    %c0_i32 = arith.constant 0 : i32
    %c0_i32_0 = arith.constant 0 : i32
    %c0_i32_1 = arith.constant 0 : i32
    return %c0_i32, %c0_i32_0 : i32, i32
  }
  func.func @transform_10(%arg0: i32) -> (i32, i32) {
    %c0_i32 = arith.constant 0 : i32
    %c0_i32_0 = arith.constant 0 : i32
    %c0_i32_1 = arith.constant 0 : i32
    return %c0_i32, %c0_i32_0 : i32, i32
  }
  func.func @transform_11(%arg0: i32) -> (i32, i32) {
    %c0_i32 = arith.constant 0 : i32
    %c0_i32_0 = arith.constant 0 : i32
    return %c0_i32, %arg0 : i32, i32
  }
}

</mosaic_0001>

<llo_original>
// kernel: tpu_custom_call.1
$region0: #{tpu_custom_call.1}
  #allocation0 [shape = 'u32[]', space=smem, size = 0x4, offset = 0x4, fixed_abs, tag = 'smem constant byte address 0x4 - core index']
  #allocation1 [shape = 'u32[144,128]{1,0:T(1,128)}', space=vmem, size = 0x12000, scoped, tag = 'internal scratch']
  %s0 = inlined_call_operand.vmem [shape: f32[256,8], index: 0, kind: input, shape index: {}]
  %s1 = inlined_call_operand.vmem [shape: f32[256,5], index: 1, kind: input, shape index: {}]
  %s2 = inlined_call_operand.vmem [shape: f32[8,32], index: 2, kind: input, shape index: {}]
  %s3 = inlined_call_operand.vmem [shape: f32[5,32], index: 3, kind: input, shape index: {}]
  %s4 = inlined_call_operand.vmem [shape: f32[1,32], index: 4, kind: input, shape index: {}]
  %s5 = inlined_call_operand.vmem [shape: f32[64,32], index: 5, kind: input, shape index: {}]
  %s6 = inlined_call_operand.vmem [shape: f32[128,64], index: 6, kind: input, shape index: {}]
  %s7 = inlined_call_operand.vmem [shape: f32[64,128], index: 7, kind: input, shape index: {}]
  %s8 = inlined_call_operand.vmem [shape: f32[32,64], index: 8, kind: input, shape index: {}]
  %s9 = inlined_call_operand.vmem [shape: f32[32,1], index: 9, kind: input, shape index: {}]
  %s10 = inlined_call_operand.vmem [shape: f32[289,1], index: 10, kind: input, shape index: {}]
  %s11 = inlined_call_operand.hbm [shape: f32[1,256], index: 11, kind: output, shape index: {}]
  %s12 = sld [smem:[#allocation0]]
  $region77: #{tpu_custom_call.1} parent=0
    _
  %s14 = ssub.s32 1, %s12
  %s15 = scalar_select 0, %s14, %s12
  $region1: #{tpu_custom_call.1} parent=0
    #allocation2 [shape = 'u8[1024]{0}', space=vmem, size = 0x400, scoped, tag = 'output window, operand 0']
    #allocation3 [shape = 's32[2]{0}', space=sflag, size = 0x8, scoped, tag = 'scoped memory for tpu_custom_call.1']
    %16 = vsyncpa [#allocation3], 0
    %s17 = scalar_lea.sflag [#allocation3], 1
    %18 = vsyncpa %s17, 0
    loop: start=0, step=1, limit=4
    $region2: #{tpu_custom_call.1} parent=1 // loop_pre_header
      _
    $region3: #{tpu_custom_call.1} parent=1 // loop_header
      %s20 = sphi 0, %s24
      %p21 = scmp.ge.s32.totalorder %s20, 4
      %s30 = sphi 0, %s32
      %s33 = sphi 0, %s30
      %s34 = sphi 0, %s33
      %s50 = sphi 0, %s34
      %s56 = sphi 0, %s58
      %s59 = sphi 0, %s56
      %s60 = sphi 0, %s59
      %s76 = sphi 0, %s60
      %s80 = sphi 0, %s80
      %s82 = sphi 0, %s80
      %s83 = sphi 0, %s82
      %s97 = sphi 0, %s83
      %s101 = sphi 0, %s101
      %s103 = sphi 0, %s101
      %s104 = sphi 0, %s103
      %s118 = sphi 0, %s104
      %s122 = sphi 0, %s122
      %s124 = sphi 0, %s122
      %s125 = sphi 0, %s124
      %s139 = sphi 0, %s125
      %s143 = sphi 0, %s143
      %s145 = sphi 0, %s143
      %s146 = sphi 0, %s145
      %s160 = sphi 0, %s146
      %s164 = sphi 0, %s164
      %s166 = sphi 0, %s164
      %s167 = sphi 0, %s166
      %s181 = sphi 0, %s167
      %s185 = sphi 0, %s185
      %s187 = sphi 0, %s185
      %s188 = sphi 0, %s187
      %s202 = sphi 0, %s188
      %s206 = sphi 0, %s206
      %s208 = sphi 0, %s206
      %s209 = sphi 0, %s208
      %s223 = sphi 0, %s209
      %s227 = sphi 0, %s227
      %s229 = sphi 0, %s227
      %s230 = sphi 0, %s229
      %s244 = sphi 0, %s230
      %s248 = sphi 0, %s248
      %s250 = sphi 0, %s248
      %s251 = sphi 0, %s250
      %s265 = sphi 0, %s251
      %s271 = sphi 0, %s273
      %s274 = sphi 0, %s271
      %s275 = sphi 0, %s274
      %s291 = sphi 0, %s275
    $region4: #{tpu_custom_call.1} parent=1 // loop_header_branch
      %23 = sbr.rel (%p21) target = $region8
    $region5: #{tpu_custom_call.1} parent=1 // loop_body
      %s25 = ssub.s32 %s20, 1
      %s26 = ssub.s32 %s20, 2
      %s27 = sadd.s32 %s20, 1
      %s28 = ssub.s32 %s20, %s27
      %p29 = scmp.eq.s32.totalorder %s28, 0
      %s31 = sadd.s32 %s30, 1
      %s32 = scalar_select %p29, %s30, %s31
      %p35 = pneg %p29
      %p36 = scmp.eq.s32.totalorder %s20, 1
      %p37 = por %p35, %p36
      %p38 = scmp.ne.s32.totalorder %s30, %s33
      %p39 = scmp.eq.s32.totalorder %s20, 0
      %p40 = por %p38, %p39
      %p41 = scmp.ne.s32.totalorder %s30, %s33
      %p42 = scmp.eq.s32.totalorder %s25, 1
      %p43 = por %p41, %p42
      %p44 = scmp.ne.s32.totalorder %s33, %s34
      %p45 = scmp.eq.s32.totalorder %s25, 0
      %p46 = por %p44, %p45
      %p47 = scmp.ne.s32.totalorder %s33, %s34
      %p48 = scmp.eq.s32.totalorder %s26, 1
      %p49 = por %p47, %p48
      %p51 = scmp.ne.s32.totalorder %s34, %s50
      %p52 = scmp.eq.s32.totalorder %s26, 0
      %p53 = por %p51, %p52
      %s54 = ssub.s32 %s20, %s27
      %p55 = scmp.eq.s32.totalorder %s54, 0
      %s57 = sadd.s32 %s56, 1
      %s58 = scalar_select %p55, %s56, %s57
      %p61 = pneg %p55
      %p62 = scmp.eq.s32.totalorder %s20, 1
      %p63 = por %p61, %p62
      %p64 = scmp.ne.s32.totalorder %s56, %s59
      %p65 = scmp.eq.s32.totalorder %s20, 0
      %p66 = por %p64, %p65
      %p67 = scmp.ne.s32.totalorder %s56, %s59
      %p68 = scmp.eq.s32.totalorder %s25, 1
      %p69 = por %p67, %p68
      %p70 = scmp.ne.s32.totalorder %s59, %s60
      %p71 = scmp.eq.s32.totalorder %s25, 0
      %p72 = por %p70, %p71
      %p73 = scmp.ne.s32.totalorder %s59, %s60
      %p74 = scmp.eq.s32.totalorder %s26, 1
      %p75 = por %p73, %p74
      %p77 = scmp.ne.s32.totalorder %s60, %s76
      %p78 = scmp.eq.s32.totalorder %s26, 0
      %p79 = por %p77, %p78
      %s81 = sadd.s32 %s80, 1
      %p84 = scmp.eq.s32.totalorder %s20, 1
      %p85 = scmp.ne.s32.totalorder %s80, %s82
      %p86 = scmp.eq.s32.totalorder %s20, 0
      %p87 = por %p85, %p86
      %p88 = scmp.ne.s32.totalorder %s80, %s82
      %p89 = scmp.eq.s32.totalorder %s25, 1
      %p90 = por %p88, %p89
      %p91 = scmp.ne.s32.totalorder %s82, %s83
      %p92 = scmp.eq.s32.totalorder %s25, 0
      %p93 = por %p91, %p92
      %p94 = scmp.ne.s32.totalorder %s82, %s83
      %p95 = scmp.eq.s32.totalorder %s26, 1
      %p96 = por %p94, %p95
      %p98 = scmp.ne.s32.totalorder %s83, %s97
      %p99 = scmp.eq.s32.totalorder %s26, 0
      %p100 = por %p98, %p99
      %s102 = sadd.s32 %s101, 1
      %p105 = scmp.eq.s32.totalorder %s20, 1
      %p106 = scmp.ne.s32.totalorder %s101, %s103
      %p107 = scmp.eq.s32.totalorder %s20, 0
      %p108 = por %p106, %p107
      %p109 = scmp.ne.s32.totalorder %s101, %s103
      %p110 = scmp.eq.s32.totalorder %s25, 1
      %p111 = por %p109, %p110
      %p112 = scmp.ne.s32.totalorder %s103, %s104
      %p113 = scmp.eq.s32.totalorder %s25, 0
      %p114 = por %p112, %p113
      %p115 = scmp.ne.s32.totalorder %s103, %s104
      %p116 = scmp.eq.s32.totalorder %s26, 1
      %p117 = por %p115, %p116
      %p119 = scmp.ne.s32.totalorder %s104, %s118
      %p120 = scmp.eq.s32.totalorder %s26, 0
      %p121 = por %p119, %p120
      %s123 = sadd.s32 %s122, 1
      %p126 = scmp.eq.s32.totalorder %s20, 1
      %p127 = scmp.ne.s32.totalorder %s122, %s124
      %p128 = scmp.eq.s32.totalorder %s20, 0
      %p129 = por %p127, %p128
      %p130 = scmp.ne.s32.totalorder %s122, %s124
      %p131 = scmp.eq.s32.totalorder %s25, 1
      %p132 = por %p130, %p131
      %p133 = scmp.ne.s32.totalorder %s124, %s125
      %p134 = scmp.eq.s32.totalorder %s25, 0
      %p135 = por %p133, %p134
      %p136 = scmp.ne.s32.totalorder %s124, %s125
      %p137 = scmp.eq.s32.totalorder %s26, 1
      %p138 = por %p136, %p137
      %p140 = scmp.ne.s32.totalorder %s125, %s139
      %p141 = scmp.eq.s32.totalorder %s26, 0
      %p142 = por %p140, %p141
      %s144 = sadd.s32 %s143, 1
      %p147 = scmp.eq.s32.totalorder %s20, 1
      %p148 = scmp.ne.s32.totalorder %s143, %s145
      %p149 = scmp.eq.s32.totalorder %s20, 0
      %p150 = por %p148, %p149
      %p151 = scmp.ne.s32.totalorder %s143, %s145
      %p152 = scmp.eq.s32.totalorder %s25, 1
      %p153 = por %p151, %p152
      %p154 = scmp.ne.s32.totalorder %s145, %s146
      %p155 = scmp.eq.s32.totalorder %s25, 0
      %p156 = por %p154, %p155
      %p157 = scmp.ne.s32.totalorder %s145, %s146
      %p158 = scmp.eq.s32.totalorder %s26, 1
      %p159 = por %p157, %p158
      %p161 = scmp.ne.s32.totalorder %s146, %s160
      %p162 = scmp.eq.s32.totalorder %s26, 0
      %p163 = por %p161, %p162
      %s165 = sadd.s32 %s164, 1
      %p168 = scmp.eq.s32.totalorder %s20, 1
      %p169 = scmp.ne.s32.totalorder %s164, %s166
      %p170 = scmp.eq.s32.totalorder %s20, 0
      %p171 = por %p169, %p170
      %p172 = scmp.ne.s32.totalorder %s164, %s166
      %p173 = scmp.eq.s32.totalorder %s25, 1
      %p174 = por %p172, %p173
      %p175 = scmp.ne.s32.totalorder %s166, %s167
      %p176 = scmp.eq.s32.totalorder %s25, 0
      %p177 = por %p175, %p176
      %p178 = scmp.ne.s32.totalorder %s166, %s167
      %p179 = scmp.eq.s32.totalorder %s26, 1
      %p180 = por %p178, %p179
      %p182 = scmp.ne.s32.totalorder %s167, %s181
      %p183 = scmp.eq.s32.totalorder %s26, 0
      %p184 = por %p182, %p183
      %s186 = sadd.s32 %s185, 1
      %p189 = scmp.eq.s32.totalorder %s20, 1
      %p190 = scmp.ne.s32.totalorder %s185, %s187
      %p191 = scmp.eq.s32.totalorder %s20, 0
      %p192 = por %p190, %p191
      %p193 = scmp.ne.s32.totalorder %s185, %s187
      %p194 = scmp.eq.s32.totalorder %s25, 1
      %p195 = por %p193, %p194
      %p196 = scmp.ne.s32.totalorder %s187, %s188
      %p197 = scmp.eq.s32.totalorder %s25, 0
      %p198 = por %p196, %p197
      %p199 = scmp.ne.s32.totalorder %s187, %s188
      %p200 = scmp.eq.s32.totalorder %s26, 1
      %p201 = por %p199, %p200
      %p203 = scmp.ne.s32.totalorder %s188, %s202
      %p204 = scmp.eq.s32.totalorder %s26, 0
      %p205 = por %p203, %p204
      %s207 = sadd.s32 %s206, 1
      %p210 = scmp.eq.s32.totalorder %s20, 1
      %p211 = scmp.ne.s32.totalorder %s206, %s208
      %p212 = scmp.eq.s32.totalorder %s20, 0
      %p213 = por %p211, %p212
      %p214 = scmp.ne.s32.totalorder %s206, %s208
      %p215 = scmp.eq.s32.totalorder %s25, 1
      %p216 = por %p214, %p215
      %p217 = scmp.ne.s32.totalorder %s208, %s209
      %p218 = scmp.eq.s32.totalorder %s25, 0
      %p219 = por %p217, %p218
      %p220 = scmp.ne.s32.totalorder %s208, %s209
      %p221 = scmp.eq.s32.totalorder %s26, 1
      %p222 = por %p220, %p221
      %p224 = scmp.ne.s32.totalorder %s209, %s223
      %p225 = scmp.eq.s32.totalorder %s26, 0
      %p226 = por %p224, %p225
      %s228 = sadd.s32 %s227, 1
      %p231 = scmp.eq.s32.totalorder %s20, 1
      %p232 = scmp.ne.s32.totalorder %s227, %s229
      %p233 = scmp.eq.s32.totalorder %s20, 0
      %p234 = por %p232, %p233
      %p235 = scmp.ne.s32.totalorder %s227, %s229
      %p236 = scmp.eq.s32.totalorder %s25, 1
      %p237 = por %p235, %p236
      %p238 = scmp.ne.s32.totalorder %s229, %s230
      %p239 = scmp.eq.s32.totalorder %s25, 0
      %p240 = por %p238, %p239
      %p241 = scmp.ne.s32.totalorder %s229, %s230
      %p242 = scmp.eq.s32.totalorder %s26, 1
      %p243 = por %p241, %p242
      %p245 = scmp.ne.s32.totalorder %s230, %s244
      %p246 = scmp.eq.s32.totalorder %s26, 0
      %p247 = por %p245, %p246
      %s249 = sadd.s32 %s248, 1
      %p252 = scmp.eq.s32.totalorder %s20, 1
      %p253 = scmp.ne.s32.totalorder %s248, %s250
      %p254 = scmp.eq.s32.totalorder %s20, 0
      %p255 = por %p253, %p254
      %p256 = scmp.ne.s32.totalorder %s248, %s250
      %p257 = scmp.eq.s32.totalorder %s25, 1
      %p258 = por %p256, %p257
      %p259 = scmp.ne.s32.totalorder %s250, %s251
      %p260 = scmp.eq.s32.totalorder %s25, 0
      %p261 = por %p259, %p260
      %p262 = scmp.ne.s32.totalorder %s250, %s251
      %p263 = scmp.eq.s32.totalorder %s26, 1
      %p264 = por %p262, %p263
      %p266 = scmp.ne.s32.totalorder %s251, %s265
      %p267 = scmp.eq.s32.totalorder %s26, 0
      %p268 = por %p266, %p267
      %s269 = ssub.s32 %s20, %s27
      %p270 = scmp.eq.s32.totalorder %s269, 0
      %s272 = sadd.s32 %s271, 1
      %s273 = scalar_select %p270, %s271, %s272
      %p276 = pneg %p270
      %p277 = scmp.eq.s32.totalorder %s20, 1
      %p278 = por %p276, %p277
      %p279 = scmp.ne.s32.totalorder %s271, %s274
      %p280 = scmp.eq.s32.totalorder %s20, 0
      %p281 = por %p279, %p280
      %p282 = scmp.ne.s32.totalorder %s271, %s274
      %p283 = scmp.eq.s32.totalorder %s25, 1
      %p284 = por %p282, %p283
      %p285 = scmp.ne.s32.totalorder %s274, %s275
      %p286 = scmp.eq.s32.totalorder %s25, 0
      %p287 = por %p285, %p286
      %p288 = scmp.ne.s32.totalorder %s274, %s275
      %p289 = scmp.eq.s32.totalorder %s26, 1
      %p290 = por %p288, %p289
      %p292 = scmp.ne.s32.totalorder %s275, %s291
      %p293 = scmp.eq.s32.totalorder %s26, 0
      %p294 = por %p292, %p293
      %p295 = scmp.le.s32.totalorder 1, %s20
      %p296 = scmp.lt.s32.totalorder %s20, 3
      %p297 = pnand %p295, %p296
      %p298 = pneg %p297
      // Predicated region
      $region9: #{tpu_custom_call.1} parent=5 // pred_check
        _
      $region10: #{tpu_custom_call.1} parent=5 // pred_check_branch
        %300 = sbr.rel (%p297) target = $region12
      $region11: #{tpu_custom_call.1} parent=5 // pred_region
        %s301 = ssub.s32 %s20, 1
        // Predicated region
        $region13: #{tpu_custom_call.1} parent=11 // pred_check
          %p302 = pneg %p93
        $region14: #{tpu_custom_call.1} parent=11 // pred_check_branch
          %304 = sbr.rel (%p302) target = $region16
        $region15: #{tpu_custom_call.1} parent=11 // pred_region
          _
        $region16: #{tpu_custom_call.1} parent=11 // pred_fallthru
          _
        // Predicated region
        $region17: #{tpu_custom_call.1} parent=11 // pred_check
          %p305 = pneg %p114
        $region18: #{tpu_custom_call.1} parent=11 // pred_check_branch
          %307 = sbr.rel (%p305) target = $region20
        $region19: #{tpu_custom_call.1} parent=11 // pred_region
          _
        $region20: #{tpu_custom_call.1} parent=11 // pred_fallthru
          _
        // Predicated region
        $region21: #{tpu_custom_call.1} parent=11 // pred_check
          %p308 = pneg %p135
        $region22: #{tpu_custom_call.1} parent=11 // pred_check_branch
          %310 = sbr.rel (%p308) target = $region24
        $region23: #{tpu_custom_call.1} parent=11 // pred_region
          _
        $region24: #{tpu_custom_call.1} parent=11 // pred_fallthru
          _
        // Predicated region
        $region25: #{tpu_custom_call.1} parent=11 // pred_check
          %p311 = pneg %p156
        $region26: #{tpu_custom_call.1} parent=11 // pred_check_branch
          %313 = sbr.rel (%p311) target = $region28
        $region27: #{tpu_custom_call.1} parent=11 // pred_region
          _
        $region28: #{tpu_custom_call.1} parent=11 // pred_fallthru
          _
        // Predicated region
        $region29: #{tpu_custom_call.1} parent=11 // pred_check
          %p314 = pneg %p177
        $region30: #{tpu_custom_call.1} parent=11 // pred_check_branch
          %316 = sbr.rel (%p314) target = $region32
        $region31: #{tpu_custom_call.1} parent=11 // pred_region
          _
        $region32: #{tpu_custom_call.1} parent=11 // pred_fallthru
          _
        // Predicated region
        $region33: #{tpu_custom_call.1} parent=11 // pred_check
          %p317 = pneg %p198
        $region34: #{tpu_custom_call.1} parent=11 // pred_check_branch
          %319 = sbr.rel (%p317) target = $region36
        $region35: #{tpu_custom_call.1} parent=11 // pred_region
          _
        $region36: #{tpu_custom_call.1} parent=11 // pred_fallthru
          _
        // Predicated region
        $region37: #{tpu_custom_call.1} parent=11 // pred_check
          %p320 = pneg %p219
        $region38: #{tpu_custom_call.1} parent=11 // pred_check_branch
          %322 = sbr.rel (%p320) target = $region40
        $region39: #{tpu_custom_call.1} parent=11 // pred_region
          _
        $region40: #{tpu_custom_call.1} parent=11 // pred_fallthru
          _
        // Predicated region
        $region41: #{tpu_custom_call.1} parent=11 // pred_check
          %p323 = pneg %p240
        $region42: #{tpu_custom_call.1} parent=11 // pred_check_branch
          %325 = sbr.rel (%p323) target = $region44
        $region43: #{tpu_custom_call.1} parent=11 // pred_region
          _
        $region44: #{tpu_custom_call.1} parent=11 // pred_fallthru
          _
        // Predicated region
        $region45: #{tpu_custom_call.1} parent=11 // pred_check
          %p326 = pneg %p261
        $region46: #{tpu_custom_call.1} parent=11 // pred_check_branch
          %328 = sbr.rel (%p326) target = $region48
        $region47: #{tpu_custom_call.1} parent=11 // pred_region
          _
        $region48: #{tpu_custom_call.1} parent=11 // pred_fallthru
          _
      $region12: #{tpu_custom_call.1} parent=5 // pred_fallthru
        _
      %p329 = scmp.lt.s32.totalorder %s20, 2
      // Predicated region
      $region49: #{tpu_custom_call.1} parent=5 // pred_check
        %p330 = pneg %p329
      $region50: #{tpu_custom_call.1} parent=5 // pred_check_branch
        %332 = sbr.rel (%p330) target = $region52
      $region51: #{tpu_custom_call.1} parent=5 // pred_region
        // Predicated region
        $region53: #{tpu_custom_call.1} parent=51 // pred_check
          %p333 = pneg %p40
        $region54: #{tpu_custom_call.1} parent=51 // pred_check_branch
          %335 = sbr.rel (%p333) target = $region56
        $region55: #{tpu_custom_call.1} parent=51 // pred_region
          %s336 = smul.u32 16, %s20
          %p337 = scmp.lt.s32.totalorder %s336, 31
          %s338 = scalar_select %p337, %s336, 31
          %s339 = smul.addr %s338, 8
          %s340 = scalar_lea.vmem %s0, %s339
          %s341 = smul.u32 16, %s20
        $region56: #{tpu_custom_call.1} parent=51 // pred_fallthru
          _
        // Predicated region
        $region57: #{tpu_custom_call.1} parent=51 // pred_check
          %p342 = pneg %p66
        $region58: #{tpu_custom_call.1} parent=51 // pred_check_branch
          %344 = sbr.rel (%p342) target = $region60
        $region59: #{tpu_custom_call.1} parent=51 // pred_region
          %s345 = smul.u32 16, %s20
          %p346 = scmp.lt.s32.totalorder %s345, 31
          %s347 = scalar_select %p346, %s345, 31
          %s348 = smul.addr %s347, 8
          %s349 = scalar_lea.vmem %s1, %s348
          %s350 = smul.u32 16, %s20
        $region60: #{tpu_custom_call.1} parent=51 // pred_fallthru
          _
      $region52: #{tpu_custom_call.1} parent=5 // pred_fallthru
        _
      %p351 = scmp.le.s32.totalorder 1, %s20
      %p352 = scmp.lt.s32.totalorder %s20, 3
      %p353 = pnand %p351, %p352
      %p354 = pneg %p353
      // Predicated region
      $region61: #{tpu_custom_call.1} parent=5 // pred_check
        _
      $region62: #{tpu_custom_call.1} parent=5 // pred_check_branch
        %356 = sbr.rel (%p353) target = $region64
      $region63: #{tpu_custom_call.1} parent=5 // pred_region
        %s357 = ssub.s32 %s20, 1
        %s358 = smul.u32 16, %s25
        %p359 = scmp.lt.s32.totalorder %s358, 31
        %s360 = scalar_select %p359, %s358, 31
        %s361 = smul.addr %s360, 8
        %s362 = scalar_lea.vmem %s0, %s361
        %p363 = pneg %p46
        %p364 = pneg %p43
        %s365 = smul.u32 16, %s25
        %p366 = scmp.lt.s32.totalorder %s365, 31
        %s367 = scalar_select %p366, %s365, 31
        %s368 = smul.addr %s367, 8
        %s369 = scalar_lea.vmem %s1, %s368
        %p370 = pneg %p72
        %p371 = pneg %p69
        %p372 = pneg %p93
        %p373 = pneg %p90
        %p374 = pneg %p114
        %p375 = pneg %p111
        %p376 = pneg %p135
        %p377 = pneg %p132
        %p378 = pneg %p156
        %p379 = pneg %p153
        %p380 = pneg %p177
        %p381 = pneg %p174
        %p382 = pneg %p198
        %p383 = pneg %p195
        %p384 = pneg %p219
        %p385 = pneg %p216
        %p386 = pneg %p240
        %p387 = pneg %p237
        %p388 = pneg %p261
        %p389 = pneg %p258
        %p390 = pneg %p287
        %p391 = pneg %p284
        %s392 = sand.u32 %s274, 1
        %s393 = scalar_lea.sflag [#allocation3], %s392
        %s394 = sand.u32 %s274, 1
        %s395 = scalar_lea.vmem [#allocation2], %s394
        %s396 = smul.u32 16, %s25
        %p397 = scmp.lt.s32.totalorder %s396, 31
        %s398 = scalar_select %p397, %s396, 31
        %s399 = smul.addr %s398, 8
        %s400 = scalar_lea.vmem %s0, %s399
        %s401 = smul.u32 16, %s25
        %s402 = smul.u32 16, %s25
        %p403 = scmp.lt.s32.totalorder %s402, 31
        %s404 = scalar_select %p403, %s402, 31
        %s405 = smul.addr %s404, 8
        %s406 = scalar_lea.vmem %s1, %s405
        %s407 = smul.u32 16, %s25
        %v408 = vld [vmem:[%s400] sm:$0xff]
        %v409 = vld [vmem:[%s400 + $0x8] sm:$0xff]
        %v410 = vld [vmem:[%s400 + $0x10] sm:$0xff]
        %v411 = vld [vmem:[%s400 + $0x18] sm:$0xff]
        %v412 = vld [vmem:[%s400 + $0x20] sm:$0xff]
        %v413 = vld [vmem:[%s400 + $0x28] sm:$0xff]
        %v414 = vld [vmem:[%s400 + $0x30] sm:$0xff]
        %v415 = vld [vmem:[%s400 + $0x38] sm:$0xff]
        %v416 = vld [vmem:[%s400 + $0x40] sm:$0xff]
        %v417 = vld [vmem:[%s400 + $0x48] sm:$0xff]
        %v418 = vld [vmem:[%s400 + $0x50] sm:$0xff]
        %v419 = vld [vmem:[%s400 + $0x58] sm:$0xff]
        %v420 = vld [vmem:[%s400 + $0x60] sm:$0xff]
        %v421 = vld [vmem:[%s400 + $0x68] sm:$0xff]
        %v422 = vld [vmem:[%s400 + $0x70] sm:$0xff]
        %v423 = vld [vmem:[%s400 + $0x78] sm:$0xff]
        %v424 = vld [vmem:[%s2] sm:$0xff]
        %v425 = vld [vmem:[%s406] sm:$0xff]
        %v426 = vld [vmem:[%s406 + $0x8] sm:$0xff]
        %v427 = vld [vmem:[%s406 + $0x10] sm:$0xff]
        %v428 = vld [vmem:[%s406 + $0x18] sm:$0xff]
        %v429 = vld [vmem:[%s406 + $0x20] sm:$0xff]
        %v430 = vld [vmem:[%s406 + $0x28] sm:$0xff]
        %v431 = vld [vmem:[%s406 + $0x30] sm:$0xff]
        %v432 = vld [vmem:[%s406 + $0x38] sm:$0xff]
        %v433 = vld [vmem:[%s406 + $0x40] sm:$0xff]
        %v434 = vld [vmem:[%s406 + $0x48] sm:$0xff]
        %v435 = vld [vmem:[%s406 + $0x50] sm:$0xff]
        %v436 = vld [vmem:[%s406 + $0x58] sm:$0xff]
        %v437 = vld [vmem:[%s406 + $0x60] sm:$0xff]
        %v438 = vld [vmem:[%s406 + $0x68] sm:$0xff]
        %v439 = vld [vmem:[%s406 + $0x70] sm:$0xff]
        %v440 = vld [vmem:[%s406 + $0x78] sm:$0xff]
        %v441 = vld [vmem:[%s3] sm:$0x1f]
        %vm442 = vcmask 39936
        %v444 = vsel %vm442, %v425, 0
        %v447 = vsel %vm442, %v426, 0
        %v450 = vsel %vm442, %v427, 0
        %v453 = vsel %vm442, %v428, 0
        %v456 = vsel %vm442, %v429, 0
        %v459 = vsel %vm442, %v430, 0
        %v462 = vsel %vm442, %v431, 0
        %v465 = vsel %vm442, %v432, 0
        %v468 = vsel %vm442, %v433, 0
        %v471 = vsel %vm442, %v434, 0
        %v474 = vsel %vm442, %v435, 0
        %v477 = vsel %vm442, %v436, 0
        %v480 = vsel %vm442, %v437, 0
        %v483 = vsel %vm442, %v438, 0
        %v486 = vsel %vm442, %v439, 0
        %v489 = vsel %vm442, %v440, 0
        %vm491 = vcmask 1044480
        %v493 = vsel %vm491, %v441, 0
        %495 = vmatprep.subr.mxu0 0.0
        %496 = vmatpush1.msra.mxu0 0.0
        %497 = vmatprep.subr.mxu0 0.0
        %498 = vmatpush1.msra.mxu0 0.0
        %499 = vmatprep.subr.mxu0 0.0
        %500 = vmatpush1.msra.mxu0 0.0
        %501 = vmatprep.subr.mxu0 0.0
        %502 = vmatpush1.msra.mxu0 0.0
        %503 = vmatprep.subr.mxu0 0.0
        %504 = vmatpush1.msra.mxu0 0.0
        %505 = vmatprep.subr.mxu0 0.0
        %506 = vmatpush1.msra.mxu0 0.0
        %507 = vmatprep.subr.mxu0 0.0
        %508 = vmatpush1.msra.mxu0 0.0
        %509 = vmatprep.subr.mxu0 0.0
        %510 = vmatpush1.msra.mxu0 0.0
        %511 = vmatprep.subr.mxu0 0.0
        %512 = vmatpush1.msra.mxu0 0.0
        %513 = vmatprep.subr.mxu0 0.0
        %514 = vmatpush1.msra.mxu0 0.0
        %515 = vmatprep.subr.mxu0 0.0
        %516 = vmatpush1.msra.mxu0 0.0
        %517 = vmatprep.subr.mxu0 0.0
        %518 = vmatpush1.msra.mxu0 0.0
        %519 = vmatprep.subr.mxu0 0.0
        %520 = vmatpush1.msra.mxu0 0.0
        %521 = vmatprep.subr.mxu0 0.0
        %522 = vmatpush1.msra.mxu0 0.0
        %523 = vmatprep.subr.mxu0 0.0
        %524 = vmatpush1.msra.mxu0 0.0
        %525 = vmatprep.subr.mxu0 0.0
        %526 = vmatpush1.msra.mxu0 %v493
        %527 = vmatprep.subr.mxu0 0.0
        %528 = vmatpush2.msra.mxu0 0.0
        %529 = vmatprep.subr.mxu0 0.0
        %530 = vmatpush2.msra.mxu0 0.0
        %531 = vmatprep.subr.mxu0 0.0
        %532 = vmatpush2.msra.mxu0 0.0
        %533 = vmatprep.subr.mxu0 0.0
        %534 = vmatpush2.msra.mxu0 0.0
        %535 = vmatprep.subr.mxu0 0.0
        %536 = vmatpush2.msra.mxu0 0.0
        %537 = vmatprep.subr.mxu0 0.0
        %538 = vmatpush2.msra.mxu0 0.0
        %539 = vmatprep.subr.mxu0 0.0
        %540 = vmatpush2.msra.mxu0 0.0
        %541 = vmatprep.subr.mxu0 0.0
        %542 = vmatpush2.msra.mxu0 0.0
        %543 = vmatprep.subr.mxu0 0.0
        %544 = vmatpush2.msra.mxu0 0.0
        %545 = vmatprep.subr.mxu0 0.0
        %546 = vmatpush2.msra.mxu0 0.0
        %547 = vmatprep.subr.mxu0 0.0
        %548 = vmatpush2.msra.mxu0 0.0
        %549 = vmatprep.subr.mxu0 0.0
        %550 = vmatpush2.msra.mxu0 0.0
        %551 = vmatprep.subr.mxu0 0.0
        %552 = vmatpush2.msra.mxu0 0.0
        %553 = vmatprep.subr.mxu0 0.0
        %554 = vmatpush2.msra.mxu0 0.0
        %555 = vmatprep.subr.mxu0 0.0
        %556 = vmatpush2.msra.mxu0 0.0
        %557 = vmatprep.subr.mxu0 0.0
        %558 = vmatpush2.msra.mxu0 0.0
        %559 = vmatprep.mubr.f32.mxu0 0.0
        %560 = vmatmul.mubr.f32.gmra.mxu0 %v444
        %v561 = vpop.f32.mrf.mxu0
        %v562 = vadd.f32 0.0, %v561
        %v563 = vpop.f32.mrf.mxu0
        %564 = vmatprep.mubr.f32.mxu0 0.0
        %565 = vmatmul.mubr.f32.gmra.mxu0 %v447
        %v566 = vpop.f32.mrf.mxu0
        %v567 = vadd.f32 0.0, %v566
        %v568 = vpop.f32.mrf.mxu0
        %569 = vmatprep.mubr.f32.mxu0 0.0
        %570 = vmatmul.mubr.f32.gmra.mxu0 %v450
        %v571 = vpop.f32.mrf.mxu0
        %v572 = vadd.f32 0.0, %v571
        %v573 = vpop.f32.mrf.mxu0
        %574 = vmatprep.mubr.f32.mxu0 0.0
        %575 = vmatmul.mubr.f32.gmra.mxu0 %v453
        %v576 = vpop.f32.mrf.mxu0
        %v577 = vadd.f32 0.0, %v576
        %v578 = vpop.f32.mrf.mxu0
        %579 = vmatprep.mubr.f32.mxu0 0.0
        %580 = vmatmul.mubr.f32.gmra.mxu0 %v456
        %v581 = vpop.f32.mrf.mxu0
        %v582 = vadd.f32 0.0, %v581
        %v583 = vpop.f32.mrf.mxu0
        %584 = vmatprep.mubr.f32.mxu0 0.0
        %585 = vmatmul.mubr.f32.gmra.mxu0 %v459
        %v586 = vpop.f32.mrf.mxu0
        %v587 = vadd.f32 0.0, %v586
        %v588 = vpop.f32.mrf.mxu0
        %589 = vmatprep.mubr.f32.mxu0 0.0
        %590 = vmatmul.mubr.f32.gmra.mxu0 %v462
        %v591 = vpop.f32.mrf.mxu0
        %v592 = vadd.f32 0.0, %v591
        %v593 = vpop.f32.mrf.mxu0
        %594 = vmatprep.mubr.f32.mxu0 0.0
        %595 = vmatmul.mubr.f32.gmra.mxu0 %v465
        %v596 = vpop.f32.mrf.mxu0
        %v597 = vadd.f32 0.0, %v596
        %v598 = vpop.f32.mrf.mxu0
        %599 = vmatprep.mubr.f32.mxu0 0.0
        %600 = vmatmul.mubr.f32.gmra.mxu0 %v468
        %v601 = vpop.f32.mrf.mxu0
        %v602 = vadd.f32 0.0, %v601
        %v603 = vpop.f32.mrf.mxu0
        %604 = vmatprep.mubr.f32.mxu0 0.0
        %605 = vmatmul.mubr.f32.gmra.mxu0 %v471
        %v606 = vpop.f32.mrf.mxu0
        %v607 = vadd.f32 0.0, %v606
        %v608 = vpop.f32.mrf.mxu0
        %609 = vmatprep.mubr.f32.mxu0 0.0
        %610 = vmatmul.mubr.f32.gmra.mxu0 %v474
        %v611 = vpop.f32.mrf.mxu0
        %v612 = vadd.f32 0.0, %v611
        %v613 = vpop.f32.mrf.mxu0
        %614 = vmatprep.mubr.f32.mxu0 0.0
        %615 = vmatmul.mubr.f32.gmra.mxu0 %v477
        %v616 = vpop.f32.mrf.mxu0
        %v617 = vadd.f32 0.0, %v616
        %v618 = vpop.f32.mrf.mxu0
        %619 = vmatprep.mubr.f32.mxu0 0.0
        %620 = vmatmul.mubr.f32.gmra.mxu0 %v480
        %v621 = vpop.f32.mrf.mxu0
        %v622 = vadd.f32 0.0, %v621
        %v623 = vpop.f32.mrf.mxu0
        %624 = vmatprep.mubr.f32.mxu0 0.0
        %625 = vmatmul.mubr.f32.gmra.mxu0 %v483
        %v626 = vpop.f32.mrf.mxu0
        %v627 = vadd.f32 0.0, %v626
        %v628 = vpop.f32.mrf.mxu0
        %629 = vmatprep.mubr.f32.mxu0 0.0
        %630 = vmatmul.mubr.f32.gmra.mxu0 %v486
        %v631 = vpop.f32.mrf.mxu0
        %v632 = vadd.f32 0.0, %v631
        %v633 = vpop.f32.mrf.mxu0
        %634 = vmatprep.mubr.f32.mxu0 0.0
        %635 = vmatmul.mubr.f32.gmra.mxu0 %v489
        %v636 = vpop.f32.mrf.mxu0
        %v637 = vadd.f32 0.0, %v636
        %v638 = vpop.f32.mrf.mxu0
        %639 = vdwg.mxu0
        %vm640 = vcmask 64512
        %v642 = vsel %vm640, %v408, 0
        %v645 = vsel %vm640, %v409, 0
        %v648 = vsel %vm640, %v410, 0
        %v651 = vsel %vm640, %v411, 0
        %v654 = vsel %vm640, %v412, 0
        %v657 = vsel %vm640, %v413, 0
        %v660 = vsel %vm640, %v414, 0
        %v663 = vsel %vm640, %v415, 0
        %v666 = vsel %vm640, %v416, 0
        %v669 = vsel %vm640, %v417, 0
        %v672 = vsel %vm640, %v418, 0
        %v675 = vsel %vm640, %v419, 0
        %v678 = vsel %vm640, %v420, 0
        %v681 = vsel %vm640, %v421, 0
        %v684 = vsel %vm640, %v422, 0
        %v687 = vsel %vm640, %v423, 0
        %689 = vmatprep.subr.mxu0 0.0
        %690 = vmatpush1.msra.mxu0 0.0
        %691 = vmatprep.subr.mxu0 0.0
        %692 = vmatpush1.msra.mxu0 0.0
        %693 = vmatprep.subr.mxu0 0.0
        %694 = vmatpush1.msra.mxu0 0.0
        %695 = vmatprep.subr.mxu0 0.0
        %696 = vmatpush1.msra.mxu0 0.0
        %697 = vmatprep.subr.mxu0 0.0
        %698 = vmatpush1.msra.mxu0 0.0
        %699 = vmatprep.subr.mxu0 0.0
        %700 = vmatpush1.msra.mxu0 0.0
        %701 = vmatprep.subr.mxu0 0.0
        %702 = vmatpush1.msra.mxu0 0.0
        %703 = vmatprep.subr.mxu0 0.0
        %704 = vmatpush1.msra.mxu0 0.0
        %705 = vmatprep.subr.mxu0 0.0
        %706 = vmatpush1.msra.mxu0 0.0
        %707 = vmatprep.subr.mxu0 0.0
        %708 = vmatpush1.msra.mxu0 0.0
        %709 = vmatprep.subr.mxu0 0.0
        %710 = vmatpush1.msra.mxu0 0.0
        %711 = vmatprep.subr.mxu0 0.0
        %712 = vmatpush1.msra.mxu0 0.0
        %713 = vmatprep.subr.mxu0 0.0
        %714 = vmatpush1.msra.mxu0 0.0
        %715 = vmatprep.subr.mxu0 0.0
        %716 = vmatpush1.msra.mxu0 0.0
        %717 = vmatprep.subr.mxu0 0.0
        %718 = vmatpush1.msra.mxu0 0.0
        %719 = vmatprep.subr.mxu0 0.0
        %720 = vmatpush1.msra.mxu0 %v424
        %721 = vmatprep.subr.mxu0 0.0
        %722 = vmatpush2.msra.mxu0 0.0
        %723 = vmatprep.subr.mxu0 0.0
        %724 = vmatpush2.msra.mxu0 0.0
        %725 = vmatprep.subr.mxu0 0.0
        %726 = vmatpush2.msra.mxu0 0.0
        %727 = vmatprep.subr.mxu0 0.0
        %728 = vmatpush2.msra.mxu0 0.0
        %729 = vmatprep.subr.mxu0 0.0
        %730 = vmatpush2.msra.mxu0 0.0
        %731 = vmatprep.subr.mxu0 0.0
        %732 = vmatpush2.msra.mxu0 0.0
        %733 = vmatprep.subr.mxu0 0.0
        %734 = vmatpush2.msra.mxu0 0.0
        %735 = vmatprep.subr.mxu0 0.0
        %736 = vmatpush2.msra.mxu0 0.0
        %737 = vmatprep.subr.mxu0 0.0
        %738 = vmatpush2.msra.mxu0 0.0
        %739 = vmatprep.subr.mxu0 0.0
        %740 = vmatpush2.msra.mxu0 0.0
        %741 = vmatprep.subr.mxu0 0.0
        %742 = vmatpush2.msra.mxu0 0.0
        %743 = vmatprep.subr.mxu0 0.0
        %744 = vmatpush2.msra.mxu0 0.0
        %745 = vmatprep.subr.mxu0 0.0
        %746 = vmatpush2.msra.mxu0 0.0
        %747 = vmatprep.subr.mxu0 0.0
        %748 = vmatpush2.msra.mxu0 0.0
        %749 = vmatprep.subr.mxu0 0.0
        %750 = vmatpush2.msra.mxu0 0.0
        %751 = vmatprep.subr.mxu0 0.0
        %752 = vmatpush2.msra.mxu0 0.0
        %753 = vmatprep.mubr.f32.mxu0 0.0
        %754 = vmatmul.mubr.f32.gmra.mxu0 %v642
        %v755 = vpop.f32.mrf.mxu0
        %v756 = vadd.f32 %v562, %v755
        %v757 = vpop.f32.mrf.mxu0
        %758 = vmatprep.mubr.f32.mxu0 0.0
        %759 = vmatmul.mubr.f32.gmra.mxu0 %v645
        %v760 = vpop.f32.mrf.mxu0
        %v761 = vadd.f32 %v567, %v760
        %v762 = vpop.f32.mrf.mxu0
        %763 = vmatprep.mubr.f32.mxu0 0.0
        %764 = vmatmul.mubr.f32.gmra.mxu0 %v648
        %v765 = vpop.f32.mrf.mxu0
        %v766 = vadd.f32 %v572, %v765
        %v767 = vpop.f32.mrf.mxu0
        %768 = vmatprep.mubr.f32.mxu0 0.0
        %769 = vmatmul.mubr.f32.gmra.mxu0 %v651
        %v770 = vpop.f32.mrf.mxu0
        %v771 = vadd.f32 %v577, %v770
        %v772 = vpop.f32.mrf.mxu0
        %773 = vmatprep.mubr.f32.mxu0 0.0
        %774 = vmatmul.mubr.f32.gmra.mxu0 %v654
        %v775 = vpop.f32.mrf.mxu0
        %v776 = vadd.f32 %v582, %v775
        %v777 = vpop.f32.mrf.mxu0
        %778 = vmatprep.mubr.f32.mxu0 0.0
        %779 = vmatmul.mubr.f32.gmra.mxu0 %v657
        %v780 = vpop.f32.mrf.mxu0
        %v781 = vadd.f32 %v587, %v780
        %v782 = vpop.f32.mrf.mxu0
        %783 = vmatprep.mubr.f32.mxu0 0.0
        %784 = vmatmul.mubr.f32.gmra.mxu0 %v660
        %v785 = vpop.f32.mrf.mxu0
        %v786 = vadd.f32 %v592, %v785
        %v787 = vpop.f32.mrf.mxu0
        %788 = vmatprep.mubr.f32.mxu0 0.0
        %789 = vmatmul.mubr.f32.gmra.mxu0 %v663
        %v790 = vpop.f32.mrf.mxu0
        %v791 = vadd.f32 %v597, %v790
        %v792 = vpop.f32.mrf.mxu0
        %793 = vmatprep.mubr.f32.mxu0 0.0
        %794 = vmatmul.mubr.f32.gmra.mxu0 %v666
        %v795 = vpop.f32.mrf.mxu0
        %v796 = vadd.f32 %v602, %v795
        %v797 = vpop.f32.mrf.mxu0
        %798 = vmatprep.mubr.f32.mxu0 0.0
        %799 = vmatmul.mubr.f32.gmra.mxu0 %v669
        %v800 = vpop.f32.mrf.mxu0
        %v801 = vadd.f32 %v607, %v800
        %v802 = vpop.f32.mrf.mxu0
        %803 = vmatprep.mubr.f32.mxu0 0.0
        %804 = vmatmul.mubr.f32.gmra.mxu0 %v672
        %v805 = vpop.f32.mrf.mxu0
        %v806 = vadd.f32 %v612, %v805
        %v807 = vpop.f32.mrf.mxu0
        %808 = vmatprep.mubr.f32.mxu0 0.0
        %809 = vmatmul.mubr.f32.gmra.mxu0 %v675
        %v810 = vpop.f32.mrf.mxu0
        %v811 = vadd.f32 %v617, %v810
        %v812 = vpop.f32.mrf.mxu0
        %813 = vmatprep.mubr.f32.mxu0 0.0
        %814 = vmatmul.mubr.f32.gmra.mxu0 %v678
        %v815 = vpop.f32.mrf.mxu0
        %v816 = vadd.f32 %v622, %v815
        %v817 = vpop.f32.mrf.mxu0
        %818 = vmatprep.mubr.f32.mxu0 0.0
        %819 = vmatmul.mubr.f32.gmra.mxu0 %v681
        %v820 = vpop.f32.mrf.mxu0
        %v821 = vadd.f32 %v627, %v820
        %v822 = vpop.f32.mrf.mxu0
        %823 = vmatprep.mubr.f32.mxu0 0.0
        %824 = vmatmul.mubr.f32.gmra.mxu0 %v684
        %v825 = vpop.f32.mrf.mxu0
        %v826 = vadd.f32 %v632, %v825
        %v827 = vpop.f32.mrf.mxu0
        %828 = vmatprep.mubr.f32.mxu0 0.0
        %829 = vmatmul.mubr.f32.gmra.mxu0 %v687
        %v830 = vpop.f32.mrf.mxu0
        %v831 = vadd.f32 %v637, %v830
        %v832 = vpop.f32.mrf.mxu0
        %833 = vdwg.mxu0
        %v834 = vld [vmem:[%s4] sm:$0x1]
        %v836 = vlaneseq
        %v837 = vshrl.u32 %v836, 7
        %v838 = vsub.s32 0, %v837
        %v839 = vrot.slane %v834, %v838
        %v841 = vadd.f32 %v756, %v839
        %v842 = vadd.f32 %v761, %v839
        %v843 = vadd.f32 %v766, %v839
        %v844 = vadd.f32 %v771, %v839
        %v845 = vadd.f32 %v776, %v839
        %v846 = vadd.f32 %v781, %v839
        %v847 = vadd.f32 %v786, %v839
        %v848 = vadd.f32 %v791, %v839
        %v849 = vadd.f32 %v796, %v839
        %v850 = vadd.f32 %v801, %v839
        %v851 = vadd.f32 %v806, %v839
        %v852 = vadd.f32 %v811, %v839
        %v853 = vadd.f32 %v816, %v839
        %v854 = vadd.f32 %v821, %v839
        %v855 = vadd.f32 %v826, %v839
        %v856 = vadd.f32 %v831, %v839
        %vm857 = vcmp.gt.f32.partialorder %v841, 0.0
        %vm858 = vcmp.gt.f32.partialorder %v842, 0.0
        %vm859 = vcmp.gt.f32.partialorder %v843, 0.0
        %vm860 = vcmp.gt.f32.partialorder %v844, 0.0
        %vm861 = vcmp.gt.f32.partialorder %v845, 0.0
        %vm862 = vcmp.gt.f32.partialorder %v846, 0.0
        %vm863 = vcmp.gt.f32.partialorder %v847, 0.0
        %vm864 = vcmp.gt.f32.partialorder %v848, 0.0
        %vm865 = vcmp.gt.f32.partialorder %v849, 0.0
        %vm866 = vcmp.gt.f32.partialorder %v850, 0.0
        %vm867 = vcmp.gt.f32.partialorder %v851, 0.0
        %vm868 = vcmp.gt.f32.partialorder %v852, 0.0
        %vm869 = vcmp.gt.f32.partialorder %v853, 0.0
        %vm870 = vcmp.gt.f32.partialorder %v854, 0.0
        %vm871 = vcmp.gt.f32.partialorder %v855, 0.0
        %vm872 = vcmp.gt.f32.partialorder %v856, 0.0
        %v873 = vmul.f32 %v841, 0.1
        %v874 = vmul.f32 %v842, 0.1
        %v875 = vmul.f32 %v843, 0.1
        %v876 = vmul.f32 %v844, 0.1
        %v877 = vmul.f32 %v845, 0.1
        %v878 = vmul.f32 %v846, 0.1
        %v879 = vmul.f32 %v847, 0.1
        %v880 = vmul.f32 %v848, 0.1
        %v881 = vmul.f32 %v849, 0.1
        %v882 = vmul.f32 %v850, 0.1
        %v883 = vmul.f32 %v851, 0.1
        %v884 = vmul.f32 %v852, 0.1
        %v885 = vmul.f32 %v853, 0.1
        %v886 = vmul.f32 %v854, 0.1
        %v887 = vmul.f32 %v855, 0.1
        %v888 = vmul.f32 %v856, 0.1
        %v889 = vsel %vm857, %v841, %v873
        %v890 = vsel %vm858, %v842, %v874
        %v891 = vsel %vm859, %v843, %v875
        %v892 = vsel %vm860, %v844, %v876
        %v893 = vsel %vm861, %v845, %v877
        %v894 = vsel %vm862, %v846, %v878
        %v895 = vsel %vm863, %v847, %v879
        %v896 = vsel %vm864, %v848, %v880
        %v897 = vsel %vm865, %v849, %v881
        %v898 = vsel %vm866, %v850, %v882
        %v899 = vsel %vm867, %v851, %v883
        %v900 = vsel %vm868, %v852, %v884
        %v901 = vsel %vm869, %v853, %v885
        %v902 = vsel %vm870, %v854, %v886
        %v903 = vsel %vm871, %v855, %v887
        %v904 = vsel %vm872, %v856, %v888
        %v905 = vld [vmem:[%s5] sm:$0xff]
        %v906 = vld [vmem:[%s5 + $0x8] sm:$0xff]
        %v907 = vld [vmem:[%s5 + $0x10] sm:$0xff]
        %v908 = vld [vmem:[%s5 + $0x18] sm:$0xff]
        %v909 = vld [vmem:[%s5 + $0x20] sm:$0xff]
        %v910 = vld [vmem:[%s5 + $0x28] sm:$0xff]
        %v911 = vld [vmem:[%s5 + $0x30] sm:$0xff]
        %v912 = vld [vmem:[%s5 + $0x38] sm:$0xff]
        %v913 = vld [vmem:[%s10] sm:$0xff]
        %v914 = vld [vmem:[%s10 + $0x8] sm:$0xff]
        %v915 = vld [vmem:[%s10 + $0x10] sm:$0xff]
        %v916 = vld [vmem:[%s10 + $0x18] sm:$0xff]
        %v917 = vld [vmem:[%s10 + $0x20] sm:$0xff]
        %v918 = vld [vmem:[%s10 + $0x28] sm:$0xff]
        %v919 = vld [vmem:[%s10 + $0x30] sm:$0xff]
        %v920 = vld [vmem:[%s10 + $0x38] sm:$0xff]
        %922 = vset.pattern.permute.xlu0 0
        %923 = vperm.xlu0 %922, %v913
        %v924 = vpop.permute.xlu0 %923
        %927 = vset.pattern.permute.xlu0 0
        %928 = vperm.xlu0 %927, %v914
        %v929 = vpop.permute.xlu0 %928
        %932 = vset.pattern.permute.xlu0 0
        %933 = vperm.xlu0 %932, %v915
        %v934 = vpop.permute.xlu0 %933
        %937 = vset.pattern.permute.xlu0 0
        %938 = vperm.xlu0 %937, %v916
        %v939 = vpop.permute.xlu0 %938
        %942 = vset.pattern.permute.xlu0 0
        %943 = vperm.xlu0 %942, %v917
        %v944 = vpop.permute.xlu0 %943
        %947 = vset.pattern.permute.xlu0 0
        %948 = vperm.xlu0 %947, %v918
        %v949 = vpop.permute.xlu0 %948
        %952 = vset.pattern.permute.xlu0 0
        %953 = vperm.xlu0 %952, %v919
        %v954 = vpop.permute.xlu0 %953
        %957 = vset.pattern.permute.xlu0 0
        %958 = vperm.xlu0 %957, %v920
        %v959 = vpop.permute.xlu0 %958
        %vm961 = vcmask 261120
        %v963 = vsel %vm961, %v905, 0
        %v966 = vsel %vm961, %v906, 0
        %v969 = vsel %vm961, %v907, 0
        %v972 = vsel %vm961, %v908, 0
        %v975 = vsel %vm961, %v909, 0
        %v978 = vsel %vm961, %v910, 0
        %v981 = vsel %vm961, %v911, 0
        %v984 = vsel %vm961, %v912, 0
        %v987 = vsel %vm961, %v889, 0
        %v990 = vsel %vm961, %v890, 0
        %v993 = vsel %vm961, %v891, 0
        %v996 = vsel %vm961, %v892, 0
        %v999 = vsel %vm961, %v893, 0
        %v1002 = vsel %vm961, %v894, 0
        %v1005 = vsel %vm961, %v895, 0
        %v1008 = vsel %vm961, %v896, 0
        %v1011 = vsel %vm961, %v897, 0
        %v1014 = vsel %vm961, %v898, 0
        %v1017 = vsel %vm961, %v899, 0
        %v1020 = vsel %vm961, %v900, 0
        %v1023 = vsel %vm961, %v901, 0
        %v1026 = vsel %vm961, %v902, 0
        %v1029 = vsel %vm961, %v903, 0
        %v1032 = vsel %vm961, %v904, 0
        %1034 = vmatprep.subr.mxu0 0.0
        %1035 = vmatpush1.xpose.msra.mxu0 %v1032
        %1036 = vmatprep.subr.mxu0 0.0
        %1037 = vmatpush1.xpose.msra.mxu0 %v1029
        %1038 = vmatprep.subr.mxu0 0.0
        %1039 = vmatpush1.xpose.msra.mxu0 %v1026
        %1040 = vmatprep.subr.mxu0 0.0
        %1041 = vmatpush1.xpose.msra.mxu0 %v1023
        %1042 = vmatprep.subr.mxu0 0.0
        %1043 = vmatpush1.xpose.msra.mxu0 %v1020
        %1044 = vmatprep.subr.mxu0 0.0
        %1045 = vmatpush1.xpose.msra.mxu0 %v1017
        %1046 = vmatprep.subr.mxu0 0.0
        %1047 = vmatpush1.xpose.msra.mxu0 %v1014
        %1048 = vmatprep.subr.mxu0 0.0
        %1049 = vmatpush1.xpose.msra.mxu0 %v1011
        %1050 = vmatprep.subr.mxu0 0.0
        %1051 = vmatpush1.xpose.msra.mxu0 %v1008
        %1052 = vmatprep.subr.mxu0 0.0
        %1053 = vmatpush1.xpose.msra.mxu0 %v1005
        %1054 = vmatprep.subr.mxu0 0.0
        %1055 = vmatpush1.xpose.msra.mxu0 %v1002
        %1056 = vmatprep.subr.mxu0 0.0
        %1057 = vmatpush1.xpose.msra.mxu0 %v999
        %1058 = vmatprep.subr.mxu0 0.0
        %1059 = vmatpush1.xpose.msra.mxu0 %v996
        %1060 = vmatprep.subr.mxu0 0.0
        %1061 = vmatpush1.xpose.msra.mxu0 %v993
        %1062 = vmatprep.subr.mxu0 0.0
        %1063 = vmatpush1.xpose.msra.mxu0 %v990
        %1064 = vmatprep.subr.mxu0 0.0
        %1065 = vmatpush1.xpose.msra.mxu0 %v987
        %1066 = vmatprep.subr.mxu0 0.0
        %1067 = vmatpush2.xpose.msra.mxu0 0.0
        %1068 = vmatprep.subr.mxu0 0.0
        %1069 = vmatpush2.xpose.msra.mxu0 0.0
        %1070 = vmatprep.subr.mxu0 0.0
        %1071 = vmatpush2.xpose.msra.mxu0 0.0
        %1072 = vmatprep.subr.mxu0 0.0
        %1073 = vmatpush2.xpose.msra.mxu0 0.0
        %1074 = vmatprep.subr.mxu0 0.0
        %1075 = vmatpush2.xpose.msra.mxu0 0.0
        %1076 = vmatprep.subr.mxu0 0.0
        %1077 = vmatpush2.xpose.msra.mxu0 0.0
        %1078 = vmatprep.subr.mxu0 0.0
        %1079 = vmatpush2.xpose.msra.mxu0 0.0
        %1080 = vmatprep.subr.mxu0 0.0
        %1081 = vmatpush2.xpose.msra.mxu0 0.0
        %1082 = vmatprep.subr.mxu0 0.0
        %1083 = vmatpush2.xpose.msra.mxu0 0.0
        %1084 = vmatprep.subr.mxu0 0.0
        %1085 = vmatpush2.xpose.msra.mxu0 0.0
        %1086 = vmatprep.subr.mxu0 0.0
        %1087 = vmatpush2.xpose.msra.mxu0 0.0
        %1088 = vmatprep.subr.mxu0 0.0
        %1089 = vmatpush2.xpose.msra.mxu0 0.0
        %1090 = vmatprep.subr.mxu0 0.0
        %1091 = vmatpush2.xpose.msra.mxu0 0.0
        %1092 = vmatprep.subr.mxu0 0.0
        %1093 = vmatpush2.xpose.msra.mxu0 0.0
        %1094 = vmatprep.subr.mxu0 0.0
        %1095 = vmatpush2.xpose.msra.mxu0 0.0
        %1096 = vmatprep.subr.mxu0 0.0
        %1097 = vmatpush2.xpose.msra.mxu0 0.0
        %1098 = vmatprep.mubr.f32.mxu0 0.0
        %1099 = vmatmul.mubr.f32.gmra.mxu0 %v963
        %v1100 = vpop.f32.mrf.mxu0
        %v1101 = vadd.f32 %v924, %v1100
        %v1102 = vpop.f32.mrf.mxu0
        %1103 = vmatprep.mubr.f32.mxu0 0.0
        %1104 = vmatmul.mubr.f32.gmra.mxu0 %v966
        %v1105 = vpop.f32.mrf.mxu0
        %v1106 = vadd.f32 %v929, %v1105
        %v1107 = vpop.f32.mrf.mxu0
        %1108 = vmatprep.mubr.f32.mxu0 0.0
        %1109 = vmatmul.mubr.f32.gmra.mxu0 %v969
        %v1110 = vpop.f32.mrf.mxu0
        %v1111 = vadd.f32 %v934, %v1110
        %v1112 = vpop.f32.mrf.mxu0
        %1113 = vmatprep.mubr.f32.mxu0 0.0
        %1114 = vmatmul.mubr.f32.gmra.mxu0 %v972
        %v1115 = vpop.f32.mrf.mxu0
        %v1116 = vadd.f32 %v939, %v1115
        %v1117 = vpop.f32.mrf.mxu0
        %1118 = vmatprep.mubr.f32.mxu0 0.0
        %1119 = vmatmul.mubr.f32.gmra.mxu0 %v975
        %v1120 = vpop.f32.mrf.mxu0
        %v1121 = vadd.f32 %v944, %v1120
        %v1122 = vpop.f32.mrf.mxu0
        %1123 = vmatprep.mubr.f32.mxu0 0.0
        %1124 = vmatmul.mubr.f32.gmra.mxu0 %v978
        %v1125 = vpop.f32.mrf.mxu0
        %v1126 = vadd.f32 %v949, %v1125
        %v1127 = vpop.f32.mrf.mxu0
        %1128 = vmatprep.mubr.f32.mxu0 0.0
        %1129 = vmatmul.mubr.f32.gmra.mxu0 %v981
        %v1130 = vpop.f32.mrf.mxu0
        %v1131 = vadd.f32 %v954, %v1130
        %v1132 = vpop.f32.mrf.mxu0
        %1133 = vmatprep.mubr.f32.mxu0 0.0
        %1134 = vmatmul.mubr.f32.gmra.mxu0 %v984
        %v1135 = vpop.f32.mrf.mxu0
        %v1136 = vadd.f32 %v959, %v1135
        %v1137 = vpop.f32.mrf.mxu0
        %1138 = vdwg.mxu0
        %v1139 = vmax.f32 %v1101, 0.0
        %v1140 = vmax.f32 %v1106, 0.0
        %v1141 = vmax.f32 %v1111, 0.0
        %v1142 = vmax.f32 %v1116, 0.0
        %v1143 = vmax.f32 %v1121, 0.0
        %v1144 = vmax.f32 %v1126, 0.0
        %v1145 = vmax.f32 %v1131, 0.0
        %v1146 = vmax.f32 %v1136, 0.0
        %v1147 = vld [vmem:[%s6] sm:$0xff]
        %v1148 = vld [vmem:[%s6 + $0x8] sm:$0xff]
        %v1149 = vld [vmem:[%s6 + $0x10] sm:$0xff]
        %v1150 = vld [vmem:[%s6 + $0x18] sm:$0xff]
        %v1151 = vld [vmem:[%s6 + $0x20] sm:$0xff]
        %v1152 = vld [vmem:[%s6 + $0x28] sm:$0xff]
        %v1153 = vld [vmem:[%s6 + $0x30] sm:$0xff]
        %v1154 = vld [vmem:[%s6 + $0x38] sm:$0xff]
        %v1155 = vld [vmem:[%s6 + $0x40] sm:$0xff]
        %v1156 = vld [vmem:[%s6 + $0x48] sm:$0xff]
        %v1157 = vld [vmem:[%s6 + $0x50] sm:$0xff]
        %v1158 = vld [vmem:[%s6 + $0x58] sm:$0xff]
        %v1159 = vld [vmem:[%s6 + $0x60] sm:$0xff]
        %v1160 = vld [vmem:[%s6 + $0x68] sm:$0xff]
        %v1161 = vld [vmem:[%s6 + $0x70] sm:$0xff]
        %v1162 = vld [vmem:[%s6 + $0x78] sm:$0xff]
        %v1163 = vld [vmem:[%s10 + $0x40] sm:$0xff]
        %v1164 = vld [vmem:[%s10 + $0x48] sm:$0xff]
        %v1165 = vld [vmem:[%s10 + $0x50] sm:$0xff]
        %v1166 = vld [vmem:[%s10 + $0x58] sm:$0xff]
        %v1167 = vld [vmem:[%s10 + $0x60] sm:$0xff]
        %v1168 = vld [vmem:[%s10 + $0x68] sm:$0xff]
        %v1169 = vld [vmem:[%s10 + $0x70] sm:$0xff]
        %v1170 = vld [vmem:[%s10 + $0x78] sm:$0xff]
        %v1171 = vld [vmem:[%s10 + $0x80] sm:$0xff]
        %v1172 = vld [vmem:[%s10 + $0x88] sm:$0xff]
        %v1173 = vld [vmem:[%s10 + $0x90] sm:$0xff]
        %v1174 = vld [vmem:[%s10 + $0x98] sm:$0xff]
        %v1175 = vld [vmem:[%s10 + $0xa0] sm:$0xff]
        %v1176 = vld [vmem:[%s10 + $0xa8] sm:$0xff]
        %v1177 = vld [vmem:[%s10 + $0xb0] sm:$0xff]
        %v1178 = vld [vmem:[%s10 + $0xb8] sm:$0xff]
        %1180 = vset.pattern.permute.xlu0 0
        %1181 = vperm.xlu0 %1180, %v1163
        %v1182 = vpop.permute.xlu0 %1181
        %1185 = vset.pattern.permute.xlu0 0
        %1186 = vperm.xlu0 %1185, %v1164
        %v1187 = vpop.permute.xlu0 %1186
        %1190 = vset.pattern.permute.xlu0 0
        %1191 = vperm.xlu0 %1190, %v1165
        %v1192 = vpop.permute.xlu0 %1191
        %1195 = vset.pattern.permute.xlu0 0
        %1196 = vperm.xlu0 %1195, %v1166
        %v1197 = vpop.permute.xlu0 %1196
        %1200 = vset.pattern.permute.xlu0 0
        %1201 = vperm.xlu0 %1200, %v1167
        %v1202 = vpop.permute.xlu0 %1201
        %1205 = vset.pattern.permute.xlu0 0
        %1206 = vperm.xlu0 %1205, %v1168
        %v1207 = vpop.permute.xlu0 %1206
        %1210 = vset.pattern.permute.xlu0 0
        %1211 = vperm.xlu0 %1210, %v1169
        %v1212 = vpop.permute.xlu0 %1211
        %1215 = vset.pattern.permute.xlu0 0
        %1216 = vperm.xlu0 %1215, %v1170
        %v1217 = vpop.permute.xlu0 %1216
        %1220 = vset.pattern.permute.xlu0 0
        %1221 = vperm.xlu0 %1220, %v1171
        %v1222 = vpop.permute.xlu0 %1221
        %1225 = vset.pattern.permute.xlu0 0
        %1226 = vperm.xlu0 %1225, %v1172
        %v1227 = vpop.permute.xlu0 %1226
        %1230 = vset.pattern.permute.xlu0 0
        %1231 = vperm.xlu0 %1230, %v1173
        %v1232 = vpop.permute.xlu0 %1231
        %1235 = vset.pattern.permute.xlu0 0
        %1236 = vperm.xlu0 %1235, %v1174
        %v1237 = vpop.permute.xlu0 %1236
        %1240 = vset.pattern.permute.xlu0 0
        %1241 = vperm.xlu0 %1240, %v1175
        %v1242 = vpop.permute.xlu0 %1241
        %1245 = vset.pattern.permute.xlu0 0
        %1246 = vperm.xlu0 %1245, %v1176
        %v1247 = vpop.permute.xlu0 %1246
        %1250 = vset.pattern.permute.xlu0 0
        %1251 = vperm.xlu0 %1250, %v1177
        %v1252 = vpop.permute.xlu0 %1251
        %1255 = vset.pattern.permute.xlu0 0
        %1256 = vperm.xlu0 %1255, %v1178
        %v1257 = vpop.permute.xlu0 %1256
        %vm1259 = vcmask 523264
        %v1261 = vsel %vm1259, %v1147, 0
        %v1264 = vsel %vm1259, %v1148, 0
        %v1267 = vsel %vm1259, %v1149, 0
        %v1270 = vsel %vm1259, %v1150, 0
        %v1273 = vsel %vm1259, %v1151, 0
        %v1276 = vsel %vm1259, %v1152, 0
        %v1279 = vsel %vm1259, %v1153, 0
        %v1282 = vsel %vm1259, %v1154, 0
        %v1285 = vsel %vm1259, %v1155, 0
        %v1288 = vsel %vm1259, %v1156, 0
        %v1291 = vsel %vm1259, %v1157, 0
        %v1294 = vsel %vm1259, %v1158, 0
        %v1297 = vsel %vm1259, %v1159, 0
        %v1300 = vsel %vm1259, %v1160, 0
        %v1303 = vsel %vm1259, %v1161, 0
        %v1306 = vsel %vm1259, %v1162, 0
        %1308 = vmatprep.subr.mxu0 0.0
        %1309 = vmatpush1.msra.mxu0 0.0
        %1310 = vmatprep.subr.mxu0 0.0
        %1311 = vmatpush1.msra.mxu0 0.0
        %1312 = vmatprep.subr.mxu0 0.0
        %1313 = vmatpush1.msra.mxu0 0.0
        %1314 = vmatprep.subr.mxu0 0.0
        %1315 = vmatpush1.msra.mxu0 0.0
        %1316 = vmatprep.subr.mxu0 0.0
        %1317 = vmatpush1.msra.mxu0 0.0
        %1318 = vmatprep.subr.mxu0 0.0
        %1319 = vmatpush1.msra.mxu0 0.0
        %1320 = vmatprep.subr.mxu0 0.0
        %1321 = vmatpush1.msra.mxu0 0.0
        %1322 = vmatprep.subr.mxu0 0.0
        %1323 = vmatpush1.msra.mxu0 0.0
        %1324 = vmatprep.subr.mxu0 0.0
        %1325 = vmatpush1.msra.mxu0 %v1146
        %1326 = vmatprep.subr.mxu0 0.0
        %1327 = vmatpush1.msra.mxu0 %v1145
        %1328 = vmatprep.subr.mxu0 0.0
        %1329 = vmatpush1.msra.mxu0 %v1144
        %1330 = vmatprep.subr.mxu0 0.0
        %1331 = vmatpush1.msra.mxu0 %v1143
        %1332 = vmatprep.subr.mxu0 0.0
        %1333 = vmatpush1.msra.mxu0 %v1142
        %1334 = vmatprep.subr.mxu0 0.0
        %1335 = vmatpush1.msra.mxu0 %v1141
        %1336 = vmatprep.subr.mxu0 0.0
        %1337 = vmatpush1.msra.mxu0 %v1140
        %1338 = vmatprep.subr.mxu0 0.0
        %1339 = vmatpush1.msra.mxu0 %v1139
        %1340 = vmatprep.subr.mxu0 0.0
        %1341 = vmatpush2.msra.mxu0 0.0
        %1342 = vmatprep.subr.mxu0 0.0
        %1343 = vmatpush2.msra.mxu0 0.0
        %1344 = vmatprep.subr.mxu0 0.0
        %1345 = vmatpush2.msra.mxu0 0.0
        %1346 = vmatprep.subr.mxu0 0.0
        %1347 = vmatpush2.msra.mxu0 0.0
        %1348 = vmatprep.subr.mxu0 0.0
        %1349 = vmatpush2.msra.mxu0 0.0
        %1350 = vmatprep.subr.mxu0 0.0
        %1351 = vmatpush2.msra.mxu0 0.0
        %1352 = vmatprep.subr.mxu0 0.0
        %1353 = vmatpush2.msra.mxu0 0.0
        %1354 = vmatprep.subr.mxu0 0.0
        %1355 = vmatpush2.msra.mxu0 0.0
        %1356 = vmatprep.subr.mxu0 0.0
        %1357 = vmatpush2.msra.mxu0 0.0
        %1358 = vmatprep.subr.mxu0 0.0
        %1359 = vmatpush2.msra.mxu0 0.0
        %1360 = vmatprep.subr.mxu0 0.0
        %1361 = vmatpush2.msra.mxu0 0.0
        %1362 = vmatprep.subr.mxu0 0.0
        %1363 = vmatpush2.msra.mxu0 0.0
        %1364 = vmatprep.subr.mxu0 0.0
        %1365 = vmatpush2.msra.mxu0 0.0
        %1366 = vmatprep.subr.mxu0 0.0
        %1367 = vmatpush2.msra.mxu0 0.0
        %1368 = vmatprep.subr.mxu0 0.0
        %1369 = vmatpush2.msra.mxu0 0.0
        %1370 = vmatprep.subr.mxu0 0.0
        %1371 = vmatpush2.msra.mxu0 0.0
        %1372 = vmatprep.mubr.f32.mxu0 0.0
        %1373 = vmatmul.mubr.f32.gmra.mxu0 %v1261
        %v1374 = vpop.f32.mrf.mxu0
        %v1375 = vadd.f32 %v1182, %v1374
        %v1376 = vpop.f32.mrf.mxu0
        %1377 = vmatprep.mubr.f32.mxu0 0.0
        %1378 = vmatmul.mubr.f32.gmra.mxu0 %v1264
        %v1379 = vpop.f32.mrf.mxu0
        %v1380 = vadd.f32 %v1187, %v1379
        %v1381 = vpop.f32.mrf.mxu0
        %1382 = vmatprep.mubr.f32.mxu0 0.0
        %1383 = vmatmul.mubr.f32.gmra.mxu0 %v1267
        %v1384 = vpop.f32.mrf.mxu0
        %v1385 = vadd.f32 %v1192, %v1384
        %v1386 = vpop.f32.mrf.mxu0
        %1387 = vmatprep.mubr.f32.mxu0 0.0
        %1388 = vmatmul.mubr.f32.gmra.mxu0 %v1270
        %v1389 = vpop.f32.mrf.mxu0
        %v1390 = vadd.f32 %v1197, %v1389
        %v1391 = vpop.f32.mrf.mxu0
        %1392 = vmatprep.mubr.f32.mxu0 0.0
        %1393 = vmatmul.mubr.f32.gmra.mxu0 %v1273
        %v1394 = vpop.f32.mrf.mxu0
        %v1395 = vadd.f32 %v1202, %v1394
        %v1396 = vpop.f32.mrf.mxu0
        %1397 = vmatprep.mubr.f32.mxu0 0.0
        %1398 = vmatmul.mubr.f32.gmra.mxu0 %v1276
        %v1399 = vpop.f32.mrf.mxu0
        %v1400 = vadd.f32 %v1207, %v1399
        %v1401 = vpop.f32.mrf.mxu0
        %1402 = vmatprep.mubr.f32.mxu0 0.0
        %1403 = vmatmul.mubr.f32.gmra.mxu0 %v1279
        %v1404 = vpop.f32.mrf.mxu0
        %v1405 = vadd.f32 %v1212, %v1404
        %v1406 = vpop.f32.mrf.mxu0
        %1407 = vmatprep.mubr.f32.mxu0 0.0
        %1408 = vmatmul.mubr.f32.gmra.mxu0 %v1282
        %v1409 = vpop.f32.mrf.mxu0
        %v1410 = vadd.f32 %v1217, %v1409
        %v1411 = vpop.f32.mrf.mxu0
        %1412 = vmatprep.mubr.f32.mxu0 0.0
        %1413 = vmatmul.mubr.f32.gmra.mxu0 %v1285
        %v1414 = vpop.f32.mrf.mxu0
        %v1415 = vadd.f32 %v1222, %v1414
        %v1416 = vpop.f32.mrf.mxu0
        %1417 = vmatprep.mubr.f32.mxu0 0.0
        %1418 = vmatmul.mubr.f32.gmra.mxu0 %v1288
        %v1419 = vpop.f32.mrf.mxu0
        %v1420 = vadd.f32 %v1227, %v1419
        %v1421 = vpop.f32.mrf.mxu0
        %1422 = vmatprep.mubr.f32.mxu0 0.0
        %1423 = vmatmul.mubr.f32.gmra.mxu0 %v1291
        %v1424 = vpop.f32.mrf.mxu0
        %v1425 = vadd.f32 %v1232, %v1424
        %v1426 = vpop.f32.mrf.mxu0
        %1427 = vmatprep.mubr.f32.mxu0 0.0
        %1428 = vmatmul.mubr.f32.gmra.mxu0 %v1294
        %v1429 = vpop.f32.mrf.mxu0
        %v1430 = vadd.f32 %v1237, %v1429
        %v1431 = vpop.f32.mrf.mxu0
        %1432 = vmatprep.mubr.f32.mxu0 0.0
        %1433 = vmatmul.mubr.f32.gmra.mxu0 %v1297
        %v1434 = vpop.f32.mrf.mxu0
        %v1435 = vadd.f32 %v1242, %v1434
        %v1436 = vpop.f32.mrf.mxu0
        %1437 = vmatprep.mubr.f32.mxu0 0.0
        %1438 = vmatmul.mubr.f32.gmra.mxu0 %v1300
        %v1439 = vpop.f32.mrf.mxu0
        %v1440 = vadd.f32 %v1247, %v1439
        %v1441 = vpop.f32.mrf.mxu0
        %1442 = vmatprep.mubr.f32.mxu0 0.0
        %1443 = vmatmul.mubr.f32.gmra.mxu0 %v1303
        %v1444 = vpop.f32.mrf.mxu0
        %v1445 = vadd.f32 %v1252, %v1444
        %v1446 = vpop.f32.mrf.mxu0
        %1447 = vmatprep.mubr.f32.mxu0 0.0
        %1448 = vmatmul.mubr.f32.gmra.mxu0 %v1306
        %v1449 = vpop.f32.mrf.mxu0
        %v1450 = vadd.f32 %v1257, %v1449
        %v1451 = vpop.f32.mrf.mxu0
        %1452 = vdwg.mxu0
        %v1453 = vmax.f32 %v1375, 0.0
        %v1454 = vmax.f32 %v1380, 0.0
        %v1455 = vmax.f32 %v1385, 0.0
        %v1456 = vmax.f32 %v1390, 0.0
        %v1457 = vmax.f32 %v1395, 0.0
        %v1458 = vmax.f32 %v1400, 0.0
        %v1459 = vmax.f32 %v1405, 0.0
        %v1460 = vmax.f32 %v1410, 0.0
        %v1461 = vmax.f32 %v1415, 0.0
        %v1462 = vmax.f32 %v1420, 0.0
        %v1463 = vmax.f32 %v1425, 0.0
        %v1464 = vmax.f32 %v1430, 0.0
        %v1465 = vmax.f32 %v1435, 0.0
        %v1466 = vmax.f32 %v1440, 0.0
        %v1467 = vmax.f32 %v1445, 0.0
        %v1468 = vmax.f32 %v1450, 0.0
        %v1469 = vld [vmem:[%s7] sm:$0xff]
        %v1470 = vld [vmem:[%s7 + $0x8] sm:$0xff]
        %v1471 = vld [vmem:[%s7 + $0x10] sm:$0xff]
        %v1472 = vld [vmem:[%s7 + $0x18] sm:$0xff]
        %v1473 = vld [vmem:[%s7 + $0x20] sm:$0xff]
        %v1474 = vld [vmem:[%s7 + $0x28] sm:$0xff]
        %v1475 = vld [vmem:[%s7 + $0x30] sm:$0xff]
        %v1476 = vld [vmem:[%s7 + $0x38] sm:$0xff]
        %v1477 = vld [vmem:[%s10 + $0xc0] sm:$0xff]
        %v1478 = vld [vmem:[%s10 + $0xc8] sm:$0xff]
        %v1479 = vld [vmem:[%s10 + $0xd0] sm:$0xff]
        %v1480 = vld [vmem:[%s10 + $0xd8] sm:$0xff]
        %v1481 = vld [vmem:[%s10 + $0xe0] sm:$0xff]
        %v1482 = vld [vmem:[%s10 + $0xe8] sm:$0xff]
        %v1483 = vld [vmem:[%s10 + $0xf0] sm:$0xff]
        %v1484 = vld [vmem:[%s10 + $0xf8] sm:$0xff]
        %1486 = vset.pattern.permute.xlu0 0
        %1487 = vperm.xlu0 %1486, %v1477
        %v1488 = vpop.permute.xlu0 %1487
        %1491 = vset.pattern.permute.xlu0 0
        %1492 = vperm.xlu0 %1491, %v1478
        %v1493 = vpop.permute.xlu0 %1492
        %1496 = vset.pattern.permute.xlu0 0
        %1497 = vperm.xlu0 %1496, %v1479
        %v1498 = vpop.permute.xlu0 %1497
        %1501 = vset.pattern.permute.xlu0 0
        %1502 = vperm.xlu0 %1501, %v1480
        %v1503 = vpop.permute.xlu0 %1502
        %1506 = vset.pattern.permute.xlu0 0
        %1507 = vperm.xlu0 %1506, %v1481
        %v1508 = vpop.permute.xlu0 %1507
        %1511 = vset.pattern.permute.xlu0 0
        %1512 = vperm.xlu0 %1511, %v1482
        %v1513 = vpop.permute.xlu0 %1512
        %1516 = vset.pattern.permute.xlu0 0
        %1517 = vperm.xlu0 %1516, %v1483
        %v1518 = vpop.permute.xlu0 %1517
        %1521 = vset.pattern.permute.xlu0 0
        %1522 = vperm.xlu0 %1521, %v1484
        %v1523 = vpop.permute.xlu0 %1522
        %1525 = vmatprep.subr.mxu0 0.0
        %1526 = vmatpush1.msra.mxu0 %v1468
        %1527 = vmatprep.subr.mxu0 0.0
        %1528 = vmatpush1.msra.mxu0 %v1467
        %1529 = vmatprep.subr.mxu0 0.0
        %1530 = vmatpush1.msra.mxu0 %v1466
        %1531 = vmatprep.subr.mxu0 0.0
        %1532 = vmatpush1.msra.mxu0 %v1465
        %1533 = vmatprep.subr.mxu0 0.0
        %1534 = vmatpush1.msra.mxu0 %v1464
        %1535 = vmatprep.subr.mxu0 0.0
        %1536 = vmatpush1.msra.mxu0 %v1463
        %1537 = vmatprep.subr.mxu0 0.0
        %1538 = vmatpush1.msra.mxu0 %v1462
        %1539 = vmatprep.subr.mxu0 0.0
        %1540 = vmatpush1.msra.mxu0 %v1461
        %1541 = vmatprep.subr.mxu0 0.0
        %1542 = vmatpush1.msra.mxu0 %v1460
        %1543 = vmatprep.subr.mxu0 0.0
        %1544 = vmatpush1.msra.mxu0 %v1459
        %1545 = vmatprep.subr.mxu0 0.0
        %1546 = vmatpush1.msra.mxu0 %v1458
        %1547 = vmatprep.subr.mxu0 0.0
        %1548 = vmatpush1.msra.mxu0 %v1457
        %1549 = vmatprep.subr.mxu0 0.0
        %1550 = vmatpush1.msra.mxu0 %v1456
        %1551 = vmatprep.subr.mxu0 0.0
        %1552 = vmatpush1.msra.mxu0 %v1455
        %1553 = vmatprep.subr.mxu0 0.0
        %1554 = vmatpush1.msra.mxu0 %v1454
        %1555 = vmatprep.subr.mxu0 0.0
        %1556 = vmatpush1.msra.mxu0 %v1453
        %1557 = vmatprep.subr.mxu0 0.0
        %1558 = vmatpush2.msra.mxu0 0.0
        %1559 = vmatprep.subr.mxu0 0.0
        %1560 = vmatpush2.msra.mxu0 0.0
        %1561 = vmatprep.subr.mxu0 0.0
        %1562 = vmatpush2.msra.mxu0 0.0
        %1563 = vmatprep.subr.mxu0 0.0
        %1564 = vmatpush2.msra.mxu0 0.0
        %1565 = vmatprep.subr.mxu0 0.0
        %1566 = vmatpush2.msra.mxu0 0.0
        %1567 = vmatprep.subr.mxu0 0.0
        %1568 = vmatpush2.msra.mxu0 0.0
        %1569 = vmatprep.subr.mxu0 0.0
        %1570 = vmatpush2.msra.mxu0 0.0
        %1571 = vmatprep.subr.mxu0 0.0
        %1572 = vmatpush2.msra.mxu0 0.0
        %1573 = vmatprep.subr.mxu0 0.0
        %1574 = vmatpush2.msra.mxu0 0.0
        %1575 = vmatprep.subr.mxu0 0.0
        %1576 = vmatpush2.msra.mxu0 0.0
        %1577 = vmatprep.subr.mxu0 0.0
        %1578 = vmatpush2.msra.mxu0 0.0
        %1579 = vmatprep.subr.mxu0 0.0
        %1580 = vmatpush2.msra.mxu0 0.0
        %1581 = vmatprep.subr.mxu0 0.0
        %1582 = vmatpush2.msra.mxu0 0.0
        %1583 = vmatprep.subr.mxu0 0.0
        %1584 = vmatpush2.msra.mxu0 0.0
        %1585 = vmatprep.subr.mxu0 0.0
        %1586 = vmatpush2.msra.mxu0 0.0
        %1587 = vmatprep.subr.mxu0 0.0
        %1588 = vmatpush2.msra.mxu0 0.0
        %1589 = vmatprep.mubr.f32.mxu0 0.0
        %1590 = vmatmul.mubr.f32.gmra.mxu0 %v1469
        %v1591 = vpop.f32.mrf.mxu0
        %v1592 = vadd.f32 %v1488, %v1591
        %v1593 = vpop.f32.mrf.mxu0
        %1594 = vmatprep.mubr.f32.mxu0 0.0
        %1595 = vmatmul.mubr.f32.gmra.mxu0 %v1470
        %v1596 = vpop.f32.mrf.mxu0
        %v1597 = vadd.f32 %v1493, %v1596
        %v1598 = vpop.f32.mrf.mxu0
        %1599 = vmatprep.mubr.f32.mxu0 0.0
        %1600 = vmatmul.mubr.f32.gmra.mxu0 %v1471
        %v1601 = vpop.f32.mrf.mxu0
        %v1602 = vadd.f32 %v1498, %v1601
        %v1603 = vpop.f32.mrf.mxu0
        %1604 = vmatprep.mubr.f32.mxu0 0.0
        %1605 = vmatmul.mubr.f32.gmra.mxu0 %v1472
        %v1606 = vpop.f32.mrf.mxu0
        %v1607 = vadd.f32 %v1503, %v1606
        %v1608 = vpop.f32.mrf.mxu0
        %1609 = vmatprep.mubr.f32.mxu0 0.0
        %1610 = vmatmul.mubr.f32.gmra.mxu0 %v1473
        %v1611 = vpop.f32.mrf.mxu0
        %v1612 = vadd.f32 %v1508, %v1611
        %v1613 = vpop.f32.mrf.mxu0
        %1614 = vmatprep.mubr.f32.mxu0 0.0
        %1615 = vmatmul.mubr.f32.gmra.mxu0 %v1474
        %v1616 = vpop.f32.mrf.mxu0
        %v1617 = vadd.f32 %v1513, %v1616
        %v1618 = vpop.f32.mrf.mxu0
        %1619 = vmatprep.mubr.f32.mxu0 0.0
        %1620 = vmatmul.mubr.f32.gmra.mxu0 %v1475
        %v1621 = vpop.f32.mrf.mxu0
        %v1622 = vadd.f32 %v1518, %v1621
        %v1623 = vpop.f32.mrf.mxu0
        %1624 = vmatprep.mubr.f32.mxu0 0.0
        %1625 = vmatmul.mubr.f32.gmra.mxu0 %v1476
        %v1626 = vpop.f32.mrf.mxu0
        %v1627 = vadd.f32 %v1523, %v1626
        %v1628 = vpop.f32.mrf.mxu0
        %1629 = vdwg.mxu0
        %v1630 = vmax.f32 %v1592, 0.0
        %v1631 = vmax.f32 %v1597, 0.0
        %v1632 = vmax.f32 %v1602, 0.0
        %v1633 = vmax.f32 %v1607, 0.0
        %v1634 = vmax.f32 %v1612, 0.0
        %v1635 = vmax.f32 %v1617, 0.0
        %v1636 = vmax.f32 %v1622, 0.0
        %v1637 = vmax.f32 %v1627, 0.0
        %v1638 = vld [vmem:[%s8] sm:$0xff]
        %v1639 = vld [vmem:[%s8 + $0x8] sm:$0xff]
        %v1640 = vld [vmem:[%s8 + $0x10] sm:$0xff]
        %v1641 = vld [vmem:[%s8 + $0x18] sm:$0xff]
        %v1642 = vld [vmem:[%s10 + $0x100] sm:$0xff]
        %v1643 = vld [vmem:[%s10 + $0x108] sm:$0xff]
        %v1644 = vld [vmem:[%s10 + $0x110] sm:$0xff]
        %v1645 = vld [vmem:[%s10 + $0x118] sm:$0xff]
        %1647 = vset.pattern.permute.xlu0 0
        %1648 = vperm.xlu0 %1647, %v1642
        %v1649 = vpop.permute.xlu0 %1648
        %1652 = vset.pattern.permute.xlu0 0
        %1653 = vperm.xlu0 %1652, %v1643
        %v1654 = vpop.permute.xlu0 %1653
        %1657 = vset.pattern.permute.xlu0 0
        %1658 = vperm.xlu0 %1657, %v1644
        %v1659 = vpop.permute.xlu0 %1658
        %1662 = vset.pattern.permute.xlu0 0
        %1663 = vperm.xlu0 %1662, %v1645
        %v1664 = vpop.permute.xlu0 %1663
        %v1667 = vsel %vm1259, %v1638, 0
        %v1670 = vsel %vm1259, %v1639, 0
        %v1673 = vsel %vm1259, %v1640, 0
        %v1676 = vsel %vm1259, %v1641, 0
        %1678 = vmatprep.subr.mxu0 0.0
        %1679 = vmatpush1.msra.mxu0 0.0
        %1680 = vmatprep.subr.mxu0 0.0
        %1681 = vmatpush1.msra.mxu0 0.0
        %1682 = vmatprep.subr.mxu0 0.0
        %1683 = vmatpush1.msra.mxu0 0.0
        %1684 = vmatprep.subr.mxu0 0.0
        %1685 = vmatpush1.msra.mxu0 0.0
        %1686 = vmatprep.subr.mxu0 0.0
        %1687 = vmatpush1.msra.mxu0 0.0
        %1688 = vmatprep.subr.mxu0 0.0
        %1689 = vmatpush1.msra.mxu0 0.0
        %1690 = vmatprep.subr.mxu0 0.0
        %1691 = vmatpush1.msra.mxu0 0.0
        %1692 = vmatprep.subr.mxu0 0.0
        %1693 = vmatpush1.msra.mxu0 0.0
        %1694 = vmatprep.subr.mxu0 0.0
        %1695 = vmatpush1.msra.mxu0 %v1637
        %1696 = vmatprep.subr.mxu0 0.0
        %1697 = vmatpush1.msra.mxu0 %v1636
        %1698 = vmatprep.subr.mxu0 0.0
        %1699 = vmatpush1.msra.mxu0 %v1635
        %1700 = vmatprep.subr.mxu0 0.0
        %1701 = vmatpush1.msra.mxu0 %v1634
        %1702 = vmatprep.subr.mxu0 0.0
        %1703 = vmatpush1.msra.mxu0 %v1633
        %1704 = vmatprep.subr.mxu0 0.0
        %1705 = vmatpush1.msra.mxu0 %v1632
        %1706 = vmatprep.subr.mxu0 0.0
        %1707 = vmatpush1.msra.mxu0 %v1631
        %1708 = vmatprep.subr.mxu0 0.0
        %1709 = vmatpush1.msra.mxu0 %v1630
        %1710 = vmatprep.subr.mxu0 0.0
        %1711 = vmatpush2.msra.mxu0 0.0
        %1712 = vmatprep.subr.mxu0 0.0
        %1713 = vmatpush2.msra.mxu0 0.0
        %1714 = vmatprep.subr.mxu0 0.0
        %1715 = vmatpush2.msra.mxu0 0.0
        %1716 = vmatprep.subr.mxu0 0.0
        %1717 = vmatpush2.msra.mxu0 0.0
        %1718 = vmatprep.subr.mxu0 0.0
        %1719 = vmatpush2.msra.mxu0 0.0
        %1720 = vmatprep.subr.mxu0 0.0
        %1721 = vmatpush2.msra.mxu0 0.0
        %1722 = vmatprep.subr.mxu0 0.0
        %1723 = vmatpush2.msra.mxu0 0.0
        %1724 = vmatprep.subr.mxu0 0.0
        %1725 = vmatpush2.msra.mxu0 0.0
        %1726 = vmatprep.subr.mxu0 0.0
        %1727 = vmatpush2.msra.mxu0 0.0
        %1728 = vmatprep.subr.mxu0 0.0
        %1729 = vmatpush2.msra.mxu0 0.0
        %1730 = vmatprep.subr.mxu0 0.0
        %1731 = vmatpush2.msra.mxu0 0.0
        %1732 = vmatprep.subr.mxu0 0.0
        %1733 = vmatpush2.msra.mxu0 0.0
        %1734 = vmatprep.subr.mxu0 0.0
        %1735 = vmatpush2.msra.mxu0 0.0
        %1736 = vmatprep.subr.mxu0 0.0
        %1737 = vmatpush2.msra.mxu0 0.0
        %1738 = vmatprep.subr.mxu0 0.0
        %1739 = vmatpush2.msra.mxu0 0.0
        %1740 = vmatprep.subr.mxu0 0.0
        %1741 = vmatpush2.msra.mxu0 0.0
        %1742 = vmatprep.mubr.f32.mxu0 0.0
        %1743 = vmatmul.mubr.f32.gmra.mxu0 %v1667
        %v1744 = vpop.f32.mrf.mxu0
        %v1745 = vadd.f32 %v1649, %v1744
        %v1746 = vpop.f32.mrf.mxu0
        %1747 = vmatprep.mubr.f32.mxu0 0.0
        %1748 = vmatmul.mubr.f32.gmra.mxu0 %v1670
        %v1749 = vpop.f32.mrf.mxu0
        %v1750 = vadd.f32 %v1654, %v1749
        %v1751 = vpop.f32.mrf.mxu0
        %1752 = vmatprep.mubr.f32.mxu0 0.0
        %1753 = vmatmul.mubr.f32.gmra.mxu0 %v1673
        %v1754 = vpop.f32.mrf.mxu0
        %v1755 = vadd.f32 %v1659, %v1754
        %v1756 = vpop.f32.mrf.mxu0
        %1757 = vmatprep.mubr.f32.mxu0 0.0
        %1758 = vmatmul.mubr.f32.gmra.mxu0 %v1676
        %v1759 = vpop.f32.mrf.mxu0
        %v1760 = vadd.f32 %v1664, %v1759
        %v1761 = vpop.f32.mrf.mxu0
        %1762 = vdwg.mxu0
        %v1763 = vmax.f32 %v1745, 0.0
        %v1764 = vmax.f32 %v1750, 0.0
        %v1765 = vmax.f32 %v1755, 0.0
        %v1766 = vmax.f32 %v1760, 0.0
        %v1767 = vld [vmem:[%s9] sm:$0xff]
        %v1768 = vld [vmem:[%s9 + $0x8] sm:$0xff]
        %v1769 = vld [vmem:[%s9 + $0x10] sm:$0xff]
        %v1770 = vld [vmem:[%s9 + $0x18] sm:$0xff]
        %1772 = vset.pattern.permute.xlu0 0
        %1773 = vperm.xlu0 %1772, %v1767
        %v1774 = vpop.permute.xlu0 %1773
        %1777 = vset.pattern.permute.xlu0 0
        %1778 = vperm.xlu0 %1777, %v1768
        %v1779 = vpop.permute.xlu0 %1778
        %1782 = vset.pattern.permute.xlu0 0
        %1783 = vperm.xlu0 %1782, %v1769
        %v1784 = vpop.permute.xlu0 %1783
        %1787 = vset.pattern.permute.xlu0 0
        %1788 = vperm.xlu0 %1787, %v1770
        %v1789 = vpop.permute.xlu0 %1788
        %v1791 = vmul.f32 %v1774, %v1763
        %v1792 = vmul.f32 %v1779, %v1764
        %v1793 = vmul.f32 %v1784, %v1765
        %v1794 = vmul.f32 %v1789, %v1766
        %v1795 = vadd.f32 %v1791, %v1792
        %v1796 = vadd.f32 %v1795, %v1793
        %v1797 = vadd.f32 %v1796, %v1794
        %v1798 = vrot.slane %v1797, 4
        %v1799 = vadd.f32 %v1797, %v1798
        %v1800 = vrot.slane %v1799, 2
        %v1801 = vadd.f32 %v1799, %v1800
        %v1802 = vrot.slane %v1801, 1
        %v1803 = vadd.f32 %v1801, %v1802
        %v1804 = vld [vmem:[%s10 + $0x120] sm:$0x1]
        %1806 = vset.pattern.permute.xlu0 0
        %1807 = vperm.xlu0 %1806, %v1804
        %v1808 = vpop.permute.xlu0 %1807
        %v1810 = vadd.f32 %v1803, %v1808
        %1811 = vst [vmem:[%s395] sm:$0x1] %v1810
        %s1812 = sand.u32 %s274, 1
        %s1813 = scalar_lea.sflag [#allocation3], %s1812
        %s1814 = sand.u32 %s274, 1
        %s1815 = scalar_lea.vmem [#allocation2], %s1814
        // Predicated region
        $region65: #{tpu_custom_call.1} parent=63 // pred_check
          %p1816 = pneg %p284
        $region66: #{tpu_custom_call.1} parent=63 // pred_check_branch
          %1818 = sbr.rel (%p1816) target = $region68
        $region67: #{tpu_custom_call.1} parent=63 // pred_region
          %s1820 = ssub.s32 16, 16
          %1821 = vsyncadd %s1813, %s1820
          %s1822 = smul.addr %s25, 16
          %s1823 = scalar_lea.hbm %s11, %s1822
          %s1825 = sshll.u32 %s1815, 4
          %s1826 = int_to_ptr.vmem [resolvable:$true] %s1825
          %1828 = dma.vmem_to_hbm [thread:$0]  %s1826, 16, %s1823, %s1813
        $region68: #{tpu_custom_call.1} parent=63 // pred_fallthru
          _
      $region64: #{tpu_custom_call.1} parent=5 // pred_fallthru
        _
      %p1829 = scmp.le.s32.totalorder 2, %s20
      // Predicated region
      $region69: #{tpu_custom_call.1} parent=5 // pred_check
        %p1830 = pneg %p1829
      $region70: #{tpu_custom_call.1} parent=5 // pred_check_branch
        %1832 = sbr.rel (%p1830) target = $region72
      $region71: #{tpu_custom_call.1} parent=5 // pred_region
        %s1833 = ssub.s32 %s20, 2
        // Predicated region
        $region73: #{tpu_custom_call.1} parent=71 // pred_check
          %p1834 = pneg %p290
        $region74: #{tpu_custom_call.1} parent=71 // pred_check_branch
          %1836 = sbr.rel (%p1834) target = $region76
        $region75: #{tpu_custom_call.1} parent=71 // pred_region
          %s1837 = sand.u32 %s275, 1
          %s1838 = scalar_lea.sflag [#allocation3], %s1837
          %s1839 = sand.u32 %s275, 1
          %s1840 = scalar_lea.vmem [#allocation2], %s1839
          %1841 = dma.done %s1838, 16
        $region76: #{tpu_custom_call.1} parent=71 // pred_fallthru
          _
      $region72: #{tpu_custom_call.1} parent=5 // pred_fallthru
        _
    $region6: #{tpu_custom_call.1} parent=1 // loop_footer
      %s24 = sadd.s32 1, %s20
    $region7: #{tpu_custom_call.1} parent=1 // loop_footer_branch
      %19 = sbr.rel target = $region3
    $region8: #{tpu_custom_call.1} parent=1 // loop_exit
      _
    %1842 = vsyncpa [#allocation3], 1
    %s1843 = scalar_lea.sflag [#allocation3], 1
    %1844 = vsyncpa %s1843, 1

</llo_original>
